<compile_context>
chip_gen: v5e
topology: v5e:2x2
jax: 0.10.0
libtpu: 0.0.40
codegen_flags: <defaults>
</compile_context>

<pallas_src>
from math import sqrt

import jax
import jax.numpy as jnp
from jax.experimental import pallas as pl
from jax.experimental.pallas import tpu as pltpu

# ---- synthetic hyperparameters (mirror Decoder.__init__) --------------------
B = 2            # batch size
T = 8            # decoder (target) sequence length
S = 10           # max source length (encoder_states time dim)
E = 16           # dec_input_size (embedding dim)
H = 32           # dec_hidden_size
V = 64           # trg_vocab_size
VP = 128         # vocab padded to a lane-dense width (multiple of 128)
L = 2            # dec_num_layers
SCALED = True            # attention_fn == 'scaled_dot_product'
PROJECT_ATT = True       # hyperparams['attention_layer']
LENGTHS = [8, 6]         # decoder_inputs['lengths'] (sorted descending)
SRC_LENS = [10, 7]       # valid source positions per batch (attention mask)

NEG_BIG = -1e30          # finite "masked" value (no NaN on fully masked rows)


# -----------------------------------------------------------------------------
# Pallas kernel: one batch element per grid step (LSTM + attention + projections)
# -----------------------------------------------------------------------------
def decoder_fwd_kernel(embs_ref, addmask_ref, enc_ref, enc_t_ref, h0_ref, c0_ref,
                       wih0_ref, whh0_ref, b0_ref,
                       wih1_ref, whh1_ref, b1_ref,
                       watt_ref, ba_ref, wo_ref, bo_ref,
                       dists_ref,
                       seq0_ref, seq1_ref):
    f32 = jnp.float32
    bf16 = jnp.bfloat16
    Tk = embs_ref.shape[1]
    Hk = h0_ref.shape[-1]

    def lstm_layer(x_seq_bf, h, c, wih_ref_, whh_ref_, b_ref_, out_seq_ref):
        # x_seq_bf: (T, Din) bf16; wih: (Din, 4H) bf16; whh: (H, 4H) bf16;
        # b = bih + bhh, (1, 4H) f32. Gate columns pre-ordered [i, f, o, g] and
        # the g columns pre-scaled by 2 so tanh(g) == 2*sigmoid(2g) - 1 (one
        # sigmoid over the whole 4H vreg per step, no per-step tanh(g)).
        xp = jnp.dot(x_seq_bf, wih_ref_[...],
                     preferred_element_type=f32) + b_ref_[...]       # (T, 4H)
        whh = whh_ref_[...]
        for t in range(Tk):                        # static unroll (T is small)
            gates = xp[t:t + 1, :] + jnp.dot(h.astype(bf16), whh,
                                             preferred_element_type=f32)  # (1, 4H)
            sig = jax.nn.sigmoid(gates)            # i, f, o, g in one EUP pass
            i_g = sig[:, :Hk]
            f_g = sig[:, Hk:2 * Hk]
            o_g = sig[:, 2 * Hk:3 * Hk]
            g_g = 2.0 * sig[:, 3 * Hk:] - 1.0      # == tanh(original g preact)
            c = f_g * c + i_g * g_g
            h = o_g * jnp.tanh(c)
            out_seq_ref[pl.ds(t, 1), :] = h.astype(out_seq_ref.dtype)

    h0_all = h0_ref[0]                              # (L, H) f32
    c0_all = c0_ref[0]

    # layer 0
    lstm_layer(embs_ref[0], h0_all[0:1, :], c0_all[0:1, :],
               wih0_ref, whh0_ref, b0_ref, seq0_ref)
    # TODO(synk): inter-layer LSTM dropout omitted (identity / eval-mode math).
    # layer 1 (reads layer-0 outputs straight from the VMEM scratch)
    lstm_layer(seq0_ref[...], h0_all[1:2, :], c0_all[1:2, :],
               wih1_ref, whh1_ref, b1_ref, seq1_ref)
    # TODO(synk): self.dropout_layer (nn.Dropout) omitted -- identity, as in eval mode.

    # ---- attend(queries=dec, keys=enc, mask) --------------------------------
    dec_bf = seq1_ref[...]                          # (T, H) bf16
    enc_bf = enc_ref[0]                             # (S, H) bf16
    enc_t_bf = enc_t_ref[0]                         # (H, S) bf16 (pre-transposed)

    scores = jnp.dot(dec_bf, enc_t_bf, preferred_element_type=f32)   # (T, S)
    if SCALED:
        scores = scores * (1.0 / sqrt(Hk))
    scores = scores + addmask_ref[0]                # additive mask (1, S)
    m = jnp.max(scores, axis=-1, keepdims=True)
    e = jnp.exp(scores - m)
    w = e * pl.reciprocal(jnp.sum(e, axis=-1, keepdims=True))        # exact
    ctx = jnp.dot(w.astype(bf16), enc_bf, preferred_element_type=f32)  # (T, H)

    # ---- attention projection (single fused matmul) + output layer ----------
    att_in = jnp.concatenate([ctx.astype(bf16), dec_bf], axis=-1)    # (T, 2H)
    hidden = jnp.dot(att_in, watt_ref[...], preferred_element_type=f32) + ba_ref[...]
    if PROJECT_ATT:
        hidden = jnp.tanh(hidden)
    # TODO(synk): only the attention + attention_layer config is implemented in-kernel;
    # the no-attention / no-projection variants would need a different weight split.
    dists_ref[0] = (jnp.dot(hidden.astype(bf16), wo_ref[...],
                            preferred_element_type=f32) + bo_ref[...])   # (T, VP)


# -----------------------------------------------------------------------------
# Wrapper (parameter plumbing, embedding lookup, packing = JAX glue)
# -----------------------------------------------------------------------------
def decoder_forward(params, ids, lengths, mask, encoder_states, initial_state):
    f32, bf16 = jnp.float32, jnp.bfloat16
    h0, c0 = initial_state                              # (L, B, H)
    embs = params['emb'][ids].astype(bf16)              # glue: embedding gather
    addmask = mask.astype(f32) * NEG_BIG                # (B, 1, S) additive mask
    enc_bf = encoder_states.astype(bf16)                # (B, S, H)
    enc_t_bf = jnp.transpose(encoder_states, (0, 2, 1)).astype(bf16)  # (B, H, S)
    h0_b = jnp.transpose(h0, (1, 0, 2))                 # (B, L, H)
    c0_b = jnp.transpose(c0, (1, 0, 2))

    def reorder_scale(w):
        # torch LSTM gate order along the 4H axis is [i, f, g, o]; reorder to
        # [i, f, o, g] (sigmoid gates contiguous) and pre-scale g by 2 so the
        # kernel can use the exact identity tanh(x) = 2*sigmoid(2x) - 1.
        i, f, g, o = jnp.split(w, 4, axis=0)
        return jnp.concatenate([i, f, o, 2.0 * g], axis=0)

    def pack_lstm(layer):
        wih = reorder_scale(params[f'wih{layer}']).T.astype(bf16)   # (Din, 4H)
        whh = reorder_scale(params[f'whh{layer}']).T.astype(bf16)   # (H, 4H)
        b = (reorder_scale(params[f'bih{layer}'])
             + reorder_scale(params[f'bhh{layer}']))[None, :].astype(f32)  # (1, 4H)
        return wih, whh, b

    wih0, whh0, b0 = pack_lstm(0)
    wih1, whh1, b1 = pack_lstm(1)

    # attention_layer: torch concatenates [context, dec_output]; rows 0..H of
    # watt.T multiply ctx, rows H..2H multiply dec -> one fused matmul in-kernel.
    watt_t = params['watt'].T.astype(bf16)               # (2H, H)
    ba = params['batt'][None, :].astype(f32)             # (1, H)

    wo = jnp.zeros((H, VP), f32).at[:, :V].set(params['wout'].T).astype(bf16)
    bo = jnp.zeros((1, VP), f32).at[:, :V].set(params['bout'][None, :])

    args = (embs, addmask, enc_bf, enc_t_bf, h0_b, c0_b,
            wih0, whh0, b0, wih1, whh1, b1,
            watt_t, ba, wo, bo)

    def batch_spec(shp):   # split the leading batch dim across the grid
        return pl.BlockSpec((1,) + shp[1:], lambda b: (b,) + (0,) * (len(shp) - 1))

    def full_spec(shp):    # weights: whole array, same block every grid step
        return pl.BlockSpec(shp, lambda b: (0,) * len(shp))

    in_specs = [
        batch_spec(embs.shape), batch_spec(addmask.shape),
        batch_spec(enc_bf.shape), batch_spec(enc_t_bf.shape),
        batch_spec(h0_b.shape), batch_spec(c0_b.shape),
        full_spec(wih0.shape), full_spec(whh0.shape), full_spec(b0.shape),
        full_spec(wih1.shape), full_spec(whh1.shape), full_spec(b1.shape),
        full_spec(watt_t.shape), full_spec(ba.shape),
        full_spec(wo.shape), full_spec(bo.shape),
    ]

    dists_pad = pl.pallas_call(
        decoder_fwd_kernel,
        out_shape=jax.ShapeDtypeStruct((B, T, VP), f32),   # lane-dense (128) store
        grid_spec=pltpu.PrefetchScalarGridSpec(
            num_scalar_prefetch=0,
            grid=(B,),
            in_specs=in_specs,
            out_specs=pl.BlockSpec((1, T, VP), lambda b: (b, 0, 0)),
            scratch_shapes=[pltpu.VMEM((T, H), jnp.bfloat16),   # layer-0 outputs
                            pltpu.VMEM((T, H), jnp.bfloat16)]), # layer-1 outputs
        compiler_params=pltpu.CompilerParams(
            dimension_semantics=("parallel",)),   # batch shards across TCs on v7x
    )(*args)

    dists_full = dists_pad[:, :, :V]                        # (B, T, V)

    # glue: reproduce pack_padded_sequence(batch_first=True).data ordering
    pack_b, pack_t = [], []
    for t in range(T):
        for b in range(B):
            if t < lengths[b]:
                pack_b.append(b)
                pack_t.append(t)
    packed = dists_full[jnp.array(pack_b), jnp.array(pack_t)]
    return dists_full, packed


# -----------------------------------------------------------------------------
# Pure-JAX reference (same math, same bf16 matmul operand casts) for verification
# -----------------------------------------------------------------------------
def reference_forward(params, ids, mask, encoder_states, initial_state):
    f32, bf16 = jnp.float32, jnp.bfloat16
    h0, c0 = initial_state
    xs = params['emb'][ids].astype(bf16)          # (B, T, E)
    enc_bf = encoder_states.astype(bf16)
    for layer in range(L):
        wih, whh = params[f'wih{layer}'], params[f'whh{layer}']
        bih, bhh = params[f'bih{layer}'], params[f'bhh{layer}']
        h, c = h0[layer], c0[layer]
        xp = (jnp.dot(xs.reshape(B * T, -1), wih.T.astype(bf16),
                      preferred_element_type=f32)
              + (bih + bhh)[None, :]).reshape(B, T, 4 * H)
        outs = []
        for t in range(T):
            gates = xp[:, t] + jnp.dot(h.astype(bf16), whh.T.astype(bf16),
                                       preferred_element_type=f32)
            i_g, f_g, g_g, o_g = jnp.split(gates, 4, axis=-1)
            c = jax.nn.sigmoid(f_g) * c + jax.nn.sigmoid(i_g) * jnp.tanh(g_g)
            h = jax.nn.sigmoid(o_g) * jnp.tanh(c)
            outs.append(h)
        xs = jnp.stack(outs, axis=1).astype(bf16)  # (B, T, H)
    dec_bf = xs

    scores = jnp.einsum('bth,bsh->bts', dec_bf, enc_bf, preferred_element_type=f32)
    if SCALED:
        scores = scores * (1.0 / sqrt(H))
    scores = jnp.where(mask, jnp.float32(NEG_BIG), scores)
    w = jax.nn.softmax(scores, axis=-1)
    ctx = jnp.einsum('bts,bsh->bth', w.astype(bf16), enc_bf,
                     preferred_element_type=f32)

    watt_t = params['watt'].T
    hidden = (jnp.dot(ctx.reshape(B * T, H).astype(bf16), watt_t[:H].astype(bf16),
                      preferred_element_type=f32)
              + jnp.dot(dec_bf.reshape(B * T, H), watt_t[H:].astype(bf16),
                        preferred_element_type=f32)
              + params['batt'][None, :])
    if PROJECT_ATT:
        hidden = jnp.tanh(hidden)
    dists = (jnp.dot(hidden.astype(bf16), params['wout'].T.astype(bf16),
                     preferred_element_type=f32) + params['bout'][None, :])
    return dists.reshape(B, T, V)


# -----------------------------------------------------------------------------
if __name__ == "__main__":
    key = jax.random.PRNGKey(0)
    ks = jax.random.split(key, 20)
    bound = 1.0 / sqrt(H)
    u = lambda k, shp: jax.random.uniform(k, shp, jnp.float32, -bound, bound)

    params = {
        'emb':  jax.random.normal(ks[0], (V, E), jnp.float32) * 0.1,
        'wih0': u(ks[1], (4 * H, E)),  'whh0': u(ks[2], (4 * H, H)),
        'bih0': u(ks[3], (4 * H,)),    'bhh0': u(ks[4], (4 * H,)),
        'wih1': u(ks[5], (4 * H, H)),  'whh1': u(ks[6], (4 * H, H)),
        'bih1': u(ks[7], (4 * H,)),    'bhh1': u(ks[8], (4 * H,)),
        'watt': u(ks[9], (H, 2 * H)),  'batt': u(ks[10], (H,)),
        'wout': u(ks[11], (V, H)),     'bout': u(ks[12], (V,)),
    }

    ids = jax.random.randint(ks[13], (B, T), 0, V, dtype=jnp.int32)
    encoder_states = jax.random.normal(ks[14], (B, S, H), jnp.float32)
    h0 = jax.random.normal(ks[15], (L, B, H), jnp.float32) * 0.1
    c0 = jax.random.normal(ks[16], (L, B, H), jnp.float32) * 0.1
    # attention mask over source positions: True = padded (masked) source slot
    mask = jnp.stack(
        [jnp.arange(S) >= SRC_LENS[b] for b in range(B)], axis=0
    ).reshape(B, 1, S)

    dists_full, packed = decoder_forward(
        params, ids, LENGTHS, mask, encoder_states, (h0, c0))
    dists_full = jax.block_until_ready(dists_full)
    packed = jax.block_until_ready(packed)

    ref = reference_forward(params, ids, mask, encoder_states, (h0, c0))
    assert packed.shape == (sum(LENGTHS), V), packed.shape
    # bf16 MXU operands in both kernel and reference; remaining delta is the
    # 2*sigmoid(2x)-1 tanh folding and op-ordering -> loose-ish tolerance.
    assert jnp.allclose(dists_full, ref, rtol=2e-2, atol=2e-2), (
        float(jnp.max(jnp.abs(dists_full - ref))))

    print("KERNEL_OK")
</pallas_src>

<mosaic_0001>
module attributes {stable_mosaic.version = 11 : i64} {
  func.func @decoder_fwd_kernel(%arg0: i32, %arg1: memref<1x8x16xbf16, #tpu.memory_space<vmem>>, %arg2: memref<1x1x10xf32, #tpu.memory_space<vmem>>, %arg3: memref<1x10x32xbf16, #tpu.memory_space<vmem>>, %arg4: memref<1x32x10xbf16, #tpu.memory_space<vmem>>, %arg5: memref<1x2x32xf32, #tpu.memory_space<vmem>>, %arg6: memref<1x2x32xf32, #tpu.memory_space<vmem>>, %arg7: memref<16x128xbf16, #tpu.memory_space<vmem>>, %arg8: memref<32x128xbf16, #tpu.memory_space<vmem>>, %arg9: memref<1x128xf32, #tpu.memory_space<vmem>>, %arg10: memref<32x128xbf16, #tpu.memory_space<vmem>>, %arg11: memref<32x128xbf16, #tpu.memory_space<vmem>>, %arg12: memref<1x128xf32, #tpu.memory_space<vmem>>, %arg13: memref<64x32xbf16, #tpu.memory_space<vmem>>, %arg14: memref<1x32xf32, #tpu.memory_space<vmem>>, %arg15: memref<32x128xbf16, #tpu.memory_space<vmem>>, %arg16: memref<1x128xf32, #tpu.memory_space<vmem>>, %arg17: memref<1x8x128xf32, #tpu.memory_space<vmem>>, %arg18: memref<8x32xbf16, #tpu.memory_space<vmem>>, %arg19: memref<8x32xbf16, #tpu.memory_space<vmem>>) attributes {dimension_semantics = [#tpu.dimension_semantics<parallel>], iteration_bounds = array<i64: 2>, scalar_prefetch = 0 : i64, scratch_operands = 2 : i64, tpu.core_type = #tpu.core_type<tc>, window_params = [{transform_indices = @transform_0, window_bounds = array<i64: 1, 8, 16>}, {transform_indices = @transform_1, window_bounds = array<i64: 1, 1, 10>}, {transform_indices = @transform_2, window_bounds = array<i64: 1, 10, 32>}, {transform_indices = @transform_3, window_bounds = array<i64: 1, 32, 10>}, {transform_indices = @transform_4, window_bounds = array<i64: 1, 2, 32>}, {transform_indices = @transform_5, window_bounds = array<i64: 1, 2, 32>}, {pipeline_mode = #tpu.pipeline_mode<synchronous>, transform_indices = @transform_6, window_bounds = array<i64: 16, 128>}, {pipeline_mode = #tpu.pipeline_mode<synchronous>, transform_indices = @transform_7, window_bounds = array<i64: 32, 128>}, {pipeline_mode = #tpu.pipeline_mode<synchronous>, transform_indices = @transform_8, window_bounds = array<i64: 1, 128>}, {pipeline_mode = #tpu.pipeline_mode<synchronous>, transform_indices = @transform_9, window_bounds = array<i64: 32, 128>}, {pipeline_mode = #tpu.pipeline_mode<synchronous>, transform_indices = @transform_10, window_bounds = array<i64: 32, 128>}, {pipeline_mode = #tpu.pipeline_mode<synchronous>, transform_indices = @transform_11, window_bounds = array<i64: 1, 128>}, {pipeline_mode = #tpu.pipeline_mode<synchronous>, transform_indices = @transform_12, window_bounds = array<i64: 64, 32>}, {pipeline_mode = #tpu.pipeline_mode<synchronous>, transform_indices = @transform_13, window_bounds = array<i64: 1, 32>}, {pipeline_mode = #tpu.pipeline_mode<synchronous>, transform_indices = @transform_14, window_bounds = array<i64: 32, 128>}, {pipeline_mode = #tpu.pipeline_mode<synchronous>, transform_indices = @transform_15, window_bounds = array<i64: 1, 128>}, {transform_indices = @transform_16, window_bounds = array<i64: 1, 8, 128>}]} {
    %c0 = arith.constant 0 : index
    %c0_0 = arith.constant 0 : index
    %c0_1 = arith.constant 0 : index
    %0 = vector.load %arg5[%c0, %c0_0, %c0_1] : memref<1x2x32xf32, #tpu.memory_space<vmem>>, vector<1x2x32xf32>
    %1 = vector.shape_cast %0 : vector<1x2x32xf32> to vector<2x32xf32>
    %c0_2 = arith.constant 0 : index
    %c0_3 = arith.constant 0 : index
    %c0_4 = arith.constant 0 : index
    %2 = vector.load %arg6[%c0_2, %c0_3, %c0_4] : memref<1x2x32xf32, #tpu.memory_space<vmem>>, vector<1x2x32xf32>
    %3 = vector.shape_cast %2 : vector<1x2x32xf32> to vector<2x32xf32>
    %c0_5 = arith.constant 0 : index
    %c0_6 = arith.constant 0 : index
    %c0_7 = arith.constant 0 : index
    %4 = vector.load %arg1[%c0_5, %c0_6, %c0_7] : memref<1x8x16xbf16, #tpu.memory_space<vmem>>, vector<1x8x16xbf16>
    %5 = vector.shape_cast %4 : vector<1x8x16xbf16> to vector<8x16xbf16>
    %6 = vector.extract_strided_slice %1 {offsets = [0, 0], sizes = [1, 32], strides = [1, 1]} : vector<2x32xf32> to vector<1x32xf32>
    %7 = vector.extract_strided_slice %3 {offsets = [0, 0], sizes = [1, 32], strides = [1, 1]} : vector<2x32xf32> to vector<1x32xf32>
    %c0_8 = arith.constant 0 : index
    %c0_9 = arith.constant 0 : index
    %8 = vector.load %arg7[%c0_8, %c0_9] : memref<16x128xbf16, #tpu.memory_space<vmem>>, vector<16x128xbf16>
    %cst = arith.constant dense<0.000000e+00> : vector<8x128xf32>
    %9 = tpu.matmul %5, %8, %cst {dimension_numbers = #tpu.dot_dimension_numbers<[1], [0], [0], [1], [0, 0, 1, 1], [], []>} : vector<8x16xbf16>, vector<16x128xbf16>, vector<8x128xf32> -> vector<8x128xf32>
    %c0_10 = arith.constant 0 : index
    %c0_11 = arith.constant 0 : index
    %10 = vector.load %arg9[%c0_10, %c0_11] : memref<1x128xf32, #tpu.memory_space<vmem>>, vector<1x128xf32>
    %11 = vector.broadcast %10 : vector<1x128xf32> to vector<8x128xf32>
    %12 = arith.addf %9, %11 : vector<8x128xf32>
    %c0_12 = arith.constant 0 : index
    %c0_13 = arith.constant 0 : index
    %13 = vector.load %arg8[%c0_12, %c0_13] : memref<32x128xbf16, #tpu.memory_space<vmem>>, vector<32x128xbf16>
    %14 = vector.extract_strided_slice %12 {offsets = [0, 0], sizes = [1, 128], strides = [1, 1]} : vector<8x128xf32> to vector<1x128xf32>
    %15 = arith.truncf %6 : vector<1x32xf32> to vector<1x32xbf16>
    %cst_14 = arith.constant dense<0.000000e+00> : vector<1x128xf32>
    %16 = tpu.matmul %15, %13, %cst_14 {dimension_numbers = #tpu.dot_dimension_numbers<[1], [0], [0], [1], [0, 0, 1, 1], [], []>} : vector<1x32xbf16>, vector<32x128xbf16>, vector<1x128xf32> -> vector<1x128xf32>
    %17 = arith.addf %14, %16 : vector<1x128xf32>
    %18 = arith.negf %17 : vector<1x128xf32>
    %19 = math.exp %18 : vector<1x128xf32>
    %cst_15 = arith.constant 1.000000e+00 : f32
    %20 = vector.broadcast %cst_15 : f32 to vector<1x128xf32>
    %21 = arith.addf %20, %19 : vector<1x128xf32>
    %22 = arith.divf %20, %21 : vector<1x128xf32>
    %23 = vector.extract_strided_slice %22 {offsets = [0, 0], sizes = [1, 32], strides = [1, 1]} : vector<1x128xf32> to vector<1x32xf32>
    %24 = vector.extract_strided_slice %22 {offsets = [0, 32], sizes = [1, 32], strides = [1, 1]} : vector<1x128xf32> to vector<1x32xf32>
    %25 = vector.extract_strided_slice %22 {offsets = [0, 64], sizes = [1, 32], strides = [1, 1]} : vector<1x128xf32> to vector<1x32xf32>
    %26 = vector.extract_strided_slice %22 {offsets = [0, 96], sizes = [1, 32], strides = [1, 1]} : vector<1x128xf32> to vector<1x32xf32>
    %cst_16 = arith.constant 2.000000e+00 : f32
    %27 = vector.broadcast %cst_16 : f32 to vector<1x32xf32>
    %28 = arith.mulf %27, %26 : vector<1x32xf32>
    %cst_17 = arith.constant 1.000000e+00 : f32
    %29 = vector.broadcast %cst_17 : f32 to vector<1x32xf32>
    %30 = arith.subf %28, %29 : vector<1x32xf32>
    %31 = arith.mulf %24, %7 : vector<1x32xf32>
    %32 = arith.mulf %23, %30 : vector<1x32xf32>
    %33 = arith.addf %31, %32 : vector<1x32xf32>
    %34 = math.tanh %33 : vector<1x32xf32>
    %35 = arith.mulf %25, %34 : vector<1x32xf32>
    %36 = arith.truncf %35 : vector<1x32xf32> to vector<1x32xbf16>
    %c0_18 = arith.constant 0 : index
    %c0_19 = arith.constant 0 : index
    %37 = vector.load %arg18[%c0_18, %c0_19] : memref<8x32xbf16, #tpu.memory_space<vmem>>, vector<1x32xbf16>
    tpu.vector_store %arg18[%c0_18, %c0_19], %36 {strides = array<i32>} : memref<8x32xbf16, #tpu.memory_space<vmem>>, vector<1x32xbf16>,
    %38 = vector.extract_strided_slice %12 {offsets = [1, 0], sizes = [1, 128], strides = [1, 1]} : vector<8x128xf32> to vector<1x128xf32>
    %39 = arith.truncf %35 : vector<1x32xf32> to vector<1x32xbf16>
    %cst_20 = arith.constant dense<0.000000e+00> : vector<1x128xf32>
    %40 = tpu.matmul %39, %13, %cst_20 {dimension_numbers = #tpu.dot_dimension_numbers<[1], [0], [0], [1], [0, 0, 1, 1], [], []>} : vector<1x32xbf16>, vector<32x128xbf16>, vector<1x128xf32> -> vector<1x128xf32>
    %41 = arith.addf %38, %40 : vector<1x128xf32>
    %42 = arith.negf %41 : vector<1x128xf32>
    %43 = math.exp %42 : vector<1x128xf32>
    %cst_21 = arith.constant 1.000000e+00 : f32
    %44 = vector.broadcast %cst_21 : f32 to vector<1x128xf32>
    %45 = arith.addf %44, %43 : vector<1x128xf32>
    %46 = arith.divf %44, %45 : vector<1x128xf32>
    %47 = vector.extract_strided_slice %46 {offsets = [0, 0], sizes = [1, 32], strides = [1, 1]} : vector<1x128xf32> to vector<1x32xf32>
    %48 = vector.extract_strided_slice %46 {offsets = [0, 32], sizes = [1, 32], strides = [1, 1]} : vector<1x128xf32> to vector<1x32xf32>
    %49 = vector.extract_strided_slice %46 {offsets = [0, 64], sizes = [1, 32], strides = [1, 1]} : vector<1x128xf32> to vector<1x32xf32>
    %50 = vector.extract_strided_slice %46 {offsets = [0, 96], sizes = [1, 32], strides = [1, 1]} : vector<1x128xf32> to vector<1x32xf32>
    %cst_22 = arith.constant 2.000000e+00 : f32
    %51 = vector.broadcast %cst_22 : f32 to vector<1x32xf32>
    %52 = arith.mulf %51, %50 : vector<1x32xf32>
    %cst_23 = arith.constant 1.000000e+00 : f32
    %53 = vector.broadcast %cst_23 : f32 to vector<1x32xf32>
    %54 = arith.subf %52, %53 : vector<1x32xf32>
    %55 = arith.mulf %48, %33 : vector<1x32xf32>
    %56 = arith.mulf %47, %54 : vector<1x32xf32>
    %57 = arith.addf %55, %56 : vector<1x32xf32>
    %58 = math.tanh %57 : vector<1x32xf32>
    %59 = arith.mulf %49, %58 : vector<1x32xf32>
    %60 = arith.truncf %59 : vector<1x32xf32> to vector<1x32xbf16>
    %c1 = arith.constant 1 : index
    %c0_24 = arith.constant 0 : index
    %61 = vector.load %arg18[%c1, %c0_24] : memref<8x32xbf16, #tpu.memory_space<vmem>>, vector<1x32xbf16>
    tpu.vector_store %arg18[%c1, %c0_24], %60 {strides = array<i32>} : memref<8x32xbf16, #tpu.memory_space<vmem>>, vector<1x32xbf16>,
    %62 = vector.extract_strided_slice %12 {offsets = [2, 0], sizes = [1, 128], strides = [1, 1]} : vector<8x128xf32> to vector<1x128xf32>
    %63 = arith.truncf %59 : vector<1x32xf32> to vector<1x32xbf16>
    %cst_25 = arith.constant dense<0.000000e+00> : vector<1x128xf32>
    %64 = tpu.matmul %63, %13, %cst_25 {dimension_numbers = #tpu.dot_dimension_numbers<[1], [0], [0], [1], [0, 0, 1, 1], [], []>} : vector<1x32xbf16>, vector<32x128xbf16>, vector<1x128xf32> -> vector<1x128xf32>
    %65 = arith.addf %62, %64 : vector<1x128xf32>
    %66 = arith.negf %65 : vector<1x128xf32>
    %67 = math.exp %66 : vector<1x128xf32>
    %cst_26 = arith.constant 1.000000e+00 : f32
    %68 = vector.broadcast %cst_26 : f32 to vector<1x128xf32>
    %69 = arith.addf %68, %67 : vector<1x128xf32>
    %70 = arith.divf %68, %69 : vector<1x128xf32>
    %71 = vector.extract_strided_slice %70 {offsets = [0, 0], sizes = [1, 32], strides = [1, 1]} : vector<1x128xf32> to vector<1x32xf32>
    %72 = vector.extract_strided_slice %70 {offsets = [0, 32], sizes = [1, 32], strides = [1, 1]} : vector<1x128xf32> to vector<1x32xf32>
    %73 = vector.extract_strided_slice %70 {offsets = [0, 64], sizes = [1, 32], strides = [1, 1]} : vector<1x128xf32> to vector<1x32xf32>
    %74 = vector.extract_strided_slice %70 {offsets = [0, 96], sizes = [1, 32], strides = [1, 1]} : vector<1x128xf32> to vector<1x32xf32>
    %cst_27 = arith.constant 2.000000e+00 : f32
    %75 = vector.broadcast %cst_27 : f32 to vector<1x32xf32>
    %76 = arith.mulf %75, %74 : vector<1x32xf32>
    %cst_28 = arith.constant 1.000000e+00 : f32
    %77 = vector.broadcast %cst_28 : f32 to vector<1x32xf32>
    %78 = arith.subf %76, %77 : vector<1x32xf32>
    %79 = arith.mulf %72, %57 : vector<1x32xf32>
    %80 = arith.mulf %71, %78 : vector<1x32xf32>
    %81 = arith.addf %79, %80 : vector<1x32xf32>
    %82 = math.tanh %81 : vector<1x32xf32>
    %83 = arith.mulf %73, %82 : vector<1x32xf32>
    %84 = arith.truncf %83 : vector<1x32xf32> to vector<1x32xbf16>
    %c2 = arith.constant 2 : index
    %c0_29 = arith.constant 0 : index
    %85 = vector.load %arg18[%c2, %c0_29] : memref<8x32xbf16, #tpu.memory_space<vmem>>, vector<1x32xbf16>
    tpu.vector_store %arg18[%c2, %c0_29], %84 {strides = array<i32>} : memref<8x32xbf16, #tpu.memory_space<vmem>>, vector<1x32xbf16>,
    %86 = vector.extract_strided_slice %12 {offsets = [3, 0], sizes = [1, 128], strides = [1, 1]} : vector<8x128xf32> to vector<1x128xf32>
    %87 = arith.truncf %83 : vector<1x32xf32> to vector<1x32xbf16>
    %cst_30 = arith.constant dense<0.000000e+00> : vector<1x128xf32>
    %88 = tpu.matmul %87, %13, %cst_30 {dimension_numbers = #tpu.dot_dimension_numbers<[1], [0], [0], [1], [0, 0, 1, 1], [], []>} : vector<1x32xbf16>, vector<32x128xbf16>, vector<1x128xf32> -> vector<1x128xf32>
    %89 = arith.addf %86, %88 : vector<1x128xf32>
    %90 = arith.negf %89 : vector<1x128xf32>
    %91 = math.exp %90 : vector<1x128xf32>
    %cst_31 = arith.constant 1.000000e+00 : f32
    %92 = vector.broadcast %cst_31 : f32 to vector<1x128xf32>
    %93 = arith.addf %92, %91 : vector<1x128xf32>
    %94 = arith.divf %92, %93 : vector<1x128xf32>
    %95 = vector.extract_strided_slice %94 {offsets = [0, 0], sizes = [1, 32], strides = [1, 1]} : vector<1x128xf32> to vector<1x32xf32>
    %96 = vector.extract_strided_slice %94 {offsets = [0, 32], sizes = [1, 32], strides = [1, 1]} : vector<1x128xf32> to vector<1x32xf32>
    %97 = vector.extract_strided_slice %94 {offsets = [0, 64], sizes = [1, 32], strides = [1, 1]} : vector<1x128xf32> to vector<1x32xf32>
    %98 = vector.extract_strided_slice %94 {offsets = [0, 96], sizes = [1, 32], strides = [1, 1]} : vector<1x128xf32> to vector<1x32xf32>
    %cst_32 = arith.constant 2.000000e+00 : f32
    %99 = vector.broadcast %cst_32 : f32 to vector<1x32xf32>
    %100 = arith.mulf %99, %98 : vector<1x32xf32>
    %cst_33 = arith.constant 1.000000e+00 : f32
    %101 = vector.broadcast %cst_33 : f32 to vector<1x32xf32>
    %102 = arith.subf %100, %101 : vector<1x32xf32>
    %103 = arith.mulf %96, %81 : vector<1x32xf32>
    %104 = arith.mulf %95, %102 : vector<1x32xf32>
    %105 = arith.addf %103, %104 : vector<1x32xf32>
    %106 = math.tanh %105 : vector<1x32xf32>
    %107 = arith.mulf %97, %106 : vector<1x32xf32>
    %108 = arith.truncf %107 : vector<1x32xf32> to vector<1x32xbf16>
    %c3 = arith.constant 3 : index
    %c0_34 = arith.constant 0 : index
    %109 = vector.load %arg18[%c3, %c0_34] : memref<8x32xbf16, #tpu.memory_space<vmem>>, vector<1x32xbf16>
    tpu.vector_store %arg18[%c3, %c0_34], %108 {strides = array<i32>} : memref<8x32xbf16, #tpu.memory_space<vmem>>, vector<1x32xbf16>,
    %110 = vector.extract_strided_slice %12 {offsets = [4, 0], sizes = [1, 128], strides = [1, 1]} : vector<8x128xf32> to vector<1x128xf32>
    %111 = arith.truncf %107 : vector<1x32xf32> to vector<1x32xbf16>
    %cst_35 = arith.constant dense<0.000000e+00> : vector<1x128xf32>
    %112 = tpu.matmul %111, %13, %cst_35 {dimension_numbers = #tpu.dot_dimension_numbers<[1], [0], [0], [1], [0, 0, 1, 1], [], []>} : vector<1x32xbf16>, vector<32x128xbf16>, vector<1x128xf32> -> vector<1x128xf32>
    %113 = arith.addf %110, %112 : vector<1x128xf32>
    %114 = arith.negf %113 : vector<1x128xf32>
    %115 = math.exp %114 : vector<1x128xf32>
    %cst_36 = arith.constant 1.000000e+00 : f32
    %116 = vector.broadcast %cst_36 : f32 to vector<1x128xf32>
    %117 = arith.addf %116, %115 : vector<1x128xf32>
    %118 = arith.divf %116, %117 : vector<1x128xf32>
    %119 = vector.extract_strided_slice %118 {offsets = [0, 0], sizes = [1, 32], strides = [1, 1]} : vector<1x128xf32> to vector<1x32xf32>
    %120 = vector.extract_strided_slice %118 {offsets = [0, 32], sizes = [1, 32], strides = [1, 1]} : vector<1x128xf32> to vector<1x32xf32>
    %121 = vector.extract_strided_slice %118 {offsets = [0, 64], sizes = [1, 32], strides = [1, 1]} : vector<1x128xf32> to vector<1x32xf32>
    %122 = vector.extract_strided_slice %118 {offsets = [0, 96], sizes = [1, 32], strides = [1, 1]} : vector<1x128xf32> to vector<1x32xf32>
    %cst_37 = arith.constant 2.000000e+00 : f32
    %123 = vector.broadcast %cst_37 : f32 to vector<1x32xf32>
    %124 = arith.mulf %123, %122 : vector<1x32xf32>
    %cst_38 = arith.constant 1.000000e+00 : f32
    %125 = vector.broadcast %cst_38 : f32 to vector<1x32xf32>
    %126 = arith.subf %124, %125 : vector<1x32xf32>
    %127 = arith.mulf %120, %105 : vector<1x32xf32>
    %128 = arith.mulf %119, %126 : vector<1x32xf32>
    %129 = arith.addf %127, %128 : vector<1x32xf32>
    %130 = math.tanh %129 : vector<1x32xf32>
    %131 = arith.mulf %121, %130 : vector<1x32xf32>
    %132 = arith.truncf %131 : vector<1x32xf32> to vector<1x32xbf16>
    %c4 = arith.constant 4 : index
    %c0_39 = arith.constant 0 : index
    %133 = vector.load %arg18[%c4, %c0_39] : memref<8x32xbf16, #tpu.memory_space<vmem>>, vector<1x32xbf16>
    tpu.vector_store %arg18[%c4, %c0_39], %132 {strides = array<i32>} : memref<8x32xbf16, #tpu.memory_space<vmem>>, vector<1x32xbf16>,
    %134 = vector.extract_strided_slice %12 {offsets = [5, 0], sizes = [1, 128], strides = [1, 1]} : vector<8x128xf32> to vector<1x128xf32>
    %135 = arith.truncf %131 : vector<1x32xf32> to vector<1x32xbf16>
    %cst_40 = arith.constant dense<0.000000e+00> : vector<1x128xf32>
    %136 = tpu.matmul %135, %13, %cst_40 {dimension_numbers = #tpu.dot_dimension_numbers<[1], [0], [0], [1], [0, 0, 1, 1], [], []>} : vector<1x32xbf16>, vector<32x128xbf16>, vector<1x128xf32> -> vector<1x128xf32>
    %137 = arith.addf %134, %136 : vector<1x128xf32>
    %138 = arith.negf %137 : vector<1x128xf32>
    %139 = math.exp %138 : vector<1x128xf32>
    %cst_41 = arith.constant 1.000000e+00 : f32
    %140 = vector.broadcast %cst_41 : f32 to vector<1x128xf32>
    %141 = arith.addf %140, %139 : vector<1x128xf32>
    %142 = arith.divf %140, %141 : vector<1x128xf32>
    %143 = vector.extract_strided_slice %142 {offsets = [0, 0], sizes = [1, 32], strides = [1, 1]} : vector<1x128xf32> to vector<1x32xf32>
    %144 = vector.extract_strided_slice %142 {offsets = [0, 32], sizes = [1, 32], strides = [1, 1]} : vector<1x128xf32> to vector<1x32xf32>
    %145 = vector.extract_strided_slice %142 {offsets = [0, 64], sizes = [1, 32], strides = [1, 1]} : vector<1x128xf32> to vector<1x32xf32>
    %146 = vector.extract_strided_slice %142 {offsets = [0, 96], sizes = [1, 32], strides = [1, 1]} : vector<1x128xf32> to vector<1x32xf32>
    %cst_42 = arith.constant 2.000000e+00 : f32
    %147 = vector.broadcast %cst_42 : f32 to vector<1x32xf32>
    %148 = arith.mulf %147, %146 : vector<1x32xf32>
    %cst_43 = arith.constant 1.000000e+00 : f32
    %149 = vector.broadcast %cst_43 : f32 to vector<1x32xf32>
    %150 = arith.subf %148, %149 : vector<1x32xf32>
    %151 = arith.mulf %144, %129 : vector<1x32xf32>
    %152 = arith.mulf %143, %150 : vector<1x32xf32>
    %153 = arith.addf %151, %152 : vector<1x32xf32>
    %154 = math.tanh %153 : vector<1x32xf32>
    %155 = arith.mulf %145, %154 : vector<1x32xf32>
    %156 = arith.truncf %155 : vector<1x32xf32> to vector<1x32xbf16>
    %c5 = arith.constant 5 : index
    %c0_44 = arith.constant 0 : index
    %157 = vector.load %arg18[%c5, %c0_44] : memref<8x32xbf16, #tpu.memory_space<vmem>>, vector<1x32xbf16>
    tpu.vector_store %arg18[%c5, %c0_44], %156 {strides = array<i32>} : memref<8x32xbf16, #tpu.memory_space<vmem>>, vector<1x32xbf16>,
    %158 = vector.extract_strided_slice %12 {offsets = [6, 0], sizes = [1, 128], strides = [1, 1]} : vector<8x128xf32> to vector<1x128xf32>
    %159 = arith.truncf %155 : vector<1x32xf32> to vector<1x32xbf16>
    %cst_45 = arith.constant dense<0.000000e+00> : vector<1x128xf32>
    %160 = tpu.matmul %159, %13, %cst_45 {dimension_numbers = #tpu.dot_dimension_numbers<[1], [0], [0], [1], [0, 0, 1, 1], [], []>} : vector<1x32xbf16>, vector<32x128xbf16>, vector<1x128xf32> -> vector<1x128xf32>
    %161 = arith.addf %158, %160 : vector<1x128xf32>
    %162 = arith.negf %161 : vector<1x128xf32>
    %163 = math.exp %162 : vector<1x128xf32>
    %cst_46 = arith.constant 1.000000e+00 : f32
    %164 = vector.broadcast %cst_46 : f32 to vector<1x128xf32>
    %165 = arith.addf %164, %163 : vector<1x128xf32>
    %166 = arith.divf %164, %165 : vector<1x128xf32>
    %167 = vector.extract_strided_slice %166 {offsets = [0, 0], sizes = [1, 32], strides = [1, 1]} : vector<1x128xf32> to vector<1x32xf32>
    %168 = vector.extract_strided_slice %166 {offsets = [0, 32], sizes = [1, 32], strides = [1, 1]} : vector<1x128xf32> to vector<1x32xf32>
    %169 = vector.extract_strided_slice %166 {offsets = [0, 64], sizes = [1, 32], strides = [1, 1]} : vector<1x128xf32> to vector<1x32xf32>
    %170 = vector.extract_strided_slice %166 {offsets = [0, 96], sizes = [1, 32], strides = [1, 1]} : vector<1x128xf32> to vector<1x32xf32>
    %cst_47 = arith.constant 2.000000e+00 : f32
    %171 = vector.broadcast %cst_47 : f32 to vector<1x32xf32>
    %172 = arith.mulf %171, %170 : vector<1x32xf32>
    %cst_48 = arith.constant 1.000000e+00 : f32
    %173 = vector.broadcast %cst_48 : f32 to vector<1x32xf32>
    %174 = arith.subf %172, %173 : vector<1x32xf32>
    %175 = arith.mulf %168, %153 : vector<1x32xf32>
    %176 = arith.mulf %167, %174 : vector<1x32xf32>
    %177 = arith.addf %175, %176 : vector<1x32xf32>
    %178 = math.tanh %177 : vector<1x32xf32>
    %179 = arith.mulf %169, %178 : vector<1x32xf32>
    %180 = arith.truncf %179 : vector<1x32xf32> to vector<1x32xbf16>
    %c6 = arith.constant 6 : index
    %c0_49 = arith.constant 0 : index
    %181 = vector.load %arg18[%c6, %c0_49] : memref<8x32xbf16, #tpu.memory_space<vmem>>, vector<1x32xbf16>
    tpu.vector_store %arg18[%c6, %c0_49], %180 {strides = array<i32>} : memref<8x32xbf16, #tpu.memory_space<vmem>>, vector<1x32xbf16>,
    %182 = vector.extract_strided_slice %12 {offsets = [7, 0], sizes = [1, 128], strides = [1, 1]} : vector<8x128xf32> to vector<1x128xf32>
    %183 = arith.truncf %179 : vector<1x32xf32> to vector<1x32xbf16>
    %cst_50 = arith.constant dense<0.000000e+00> : vector<1x128xf32>
    %184 = tpu.matmul %183, %13, %cst_50 {dimension_numbers = #tpu.dot_dimension_numbers<[1], [0], [0], [1], [0, 0, 1, 1], [], []>} : vector<1x32xbf16>, vector<32x128xbf16>, vector<1x128xf32> -> vector<1x128xf32>
    %185 = arith.addf %182, %184 : vector<1x128xf32>
    %186 = arith.negf %185 : vector<1x128xf32>
    %187 = math.exp %186 : vector<1x128xf32>
    %cst_51 = arith.constant 1.000000e+00 : f32
    %188 = vector.broadcast %cst_51 : f32 to vector<1x128xf32>
    %189 = arith.addf %188, %187 : vector<1x128xf32>
    %190 = arith.divf %188, %189 : vector<1x128xf32>
    %191 = vector.extract_strided_slice %190 {offsets = [0, 0], sizes = [1, 32], strides = [1, 1]} : vector<1x128xf32> to vector<1x32xf32>
    %192 = vector.extract_strided_slice %190 {offsets = [0, 32], sizes = [1, 32], strides = [1, 1]} : vector<1x128xf32> to vector<1x32xf32>
    %193 = vector.extract_strided_slice %190 {offsets = [0, 64], sizes = [1, 32], strides = [1, 1]} : vector<1x128xf32> to vector<1x32xf32>
    %194 = vector.extract_strided_slice %190 {offsets = [0, 96], sizes = [1, 32], strides = [1, 1]} : vector<1x128xf32> to vector<1x32xf32>
    %cst_52 = arith.constant 2.000000e+00 : f32
    %195 = vector.broadcast %cst_52 : f32 to vector<1x32xf32>
    %196 = arith.mulf %195, %194 : vector<1x32xf32>
    %cst_53 = arith.constant 1.000000e+00 : f32
    %197 = vector.broadcast %cst_53 : f32 to vector<1x32xf32>
    %198 = arith.subf %196, %197 : vector<1x32xf32>
    %199 = arith.mulf %192, %177 : vector<1x32xf32>
    %200 = arith.mulf %191, %198 : vector<1x32xf32>
    %201 = arith.addf %199, %200 : vector<1x32xf32>
    %202 = math.tanh %201 : vector<1x32xf32>
    %203 = arith.mulf %193, %202 : vector<1x32xf32>
    %204 = arith.truncf %203 : vector<1x32xf32> to vector<1x32xbf16>
    %c7 = arith.constant 7 : index
    %c0_54 = arith.constant 0 : index
    %205 = vector.load %arg18[%c7, %c0_54] : memref<8x32xbf16, #tpu.memory_space<vmem>>, vector<1x32xbf16>
    tpu.vector_store %arg18[%c7, %c0_54], %204 {strides = array<i32>} : memref<8x32xbf16, #tpu.memory_space<vmem>>, vector<1x32xbf16>,
    %c0_55 = arith.constant 0 : index
    %c0_56 = arith.constant 0 : index
    %206 = vector.load %arg18[%c0_55, %c0_56] : memref<8x32xbf16, #tpu.memory_space<vmem>>, vector<8x32xbf16>
    %207 = vector.extract_strided_slice %1 {offsets = [1, 0], sizes = [1, 32], strides = [1, 1]} : vector<2x32xf32> to vector<1x32xf32>
    %208 = vector.extract_strided_slice %3 {offsets = [1, 0], sizes = [1, 32], strides = [1, 1]} : vector<2x32xf32> to vector<1x32xf32>
    %c0_57 = arith.constant 0 : index
    %c0_58 = arith.constant 0 : index
    %209 = vector.load %arg10[%c0_57, %c0_58] : memref<32x128xbf16, #tpu.memory_space<vmem>>, vector<32x128xbf16>
    %cst_59 = arith.constant dense<0.000000e+00> : vector<8x128xf32>
    %210 = tpu.matmul %206, %209, %cst_59 {dimension_numbers = #tpu.dot_dimension_numbers<[1], [0], [0], [1], [0, 0, 1, 1], [], []>} : vector<8x32xbf16>, vector<32x128xbf16>, vector<8x128xf32> -> vector<8x128xf32>
    %c0_60 = arith.constant 0 : index
    %c0_61 = arith.constant 0 : index
    %211 = vector.load %arg12[%c0_60, %c0_61] : memref<1x128xf32, #tpu.memory_space<vmem>>, vector<1x128xf32>
    %212 = vector.broadcast %211 : vector<1x128xf32> to vector<8x128xf32>
    %213 = arith.addf %210, %212 : vector<8x128xf32>
    %c0_62 = arith.constant 0 : index
    %c0_63 = arith.constant 0 : index
    %214 = vector.load %arg11[%c0_62, %c0_63] : memref<32x128xbf16, #tpu.memory_space<vmem>>, vector<32x128xbf16>
    %215 = vector.extract_strided_slice %213 {offsets = [0, 0], sizes = [1, 128], strides = [1, 1]} : vector<8x128xf32> to vector<1x128xf32>
    %216 = arith.truncf %207 : vector<1x32xf32> to vector<1x32xbf16>
    %cst_64 = arith.constant dense<0.000000e+00> : vector<1x128xf32>
    %217 = tpu.matmul %216, %214, %cst_64 {dimension_numbers = #tpu.dot_dimension_numbers<[1], [0], [0], [1], [0, 0, 1, 1], [], []>} : vector<1x32xbf16>, vector<32x128xbf16>, vector<1x128xf32> -> vector<1x128xf32>
    %218 = arith.addf %215, %217 : vector<1x128xf32>
    %219 = arith.negf %218 : vector<1x128xf32>
    %220 = math.exp %219 : vector<1x128xf32>
    %cst_65 = arith.constant 1.000000e+00 : f32
    %221 = vector.broadcast %cst_65 : f32 to vector<1x128xf32>
    %222 = arith.addf %221, %220 : vector<1x128xf32>
    %223 = arith.divf %221, %222 : vector<1x128xf32>
    %224 = vector.extract_strided_slice %223 {offsets = [0, 0], sizes = [1, 32], strides = [1, 1]} : vector<1x128xf32> to vector<1x32xf32>
    %225 = vector.extract_strided_slice %223 {offsets = [0, 32], sizes = [1, 32], strides = [1, 1]} : vector<1x128xf32> to vector<1x32xf32>
    %226 = vector.extract_strided_slice %223 {offsets = [0, 64], sizes = [1, 32], strides = [1, 1]} : vector<1x128xf32> to vector<1x32xf32>
    %227 = vector.extract_strided_slice %223 {offsets = [0, 96], sizes = [1, 32], strides = [1, 1]} : vector<1x128xf32> to vector<1x32xf32>
    %cst_66 = arith.constant 2.000000e+00 : f32
    %228 = vector.broadcast %cst_66 : f32 to vector<1x32xf32>
    %229 = arith.mulf %228, %227 : vector<1x32xf32>
    %cst_67 = arith.constant 1.000000e+00 : f32
    %230 = vector.broadcast %cst_67 : f32 to vector<1x32xf32>
    %231 = arith.subf %229, %230 : vector<1x32xf32>
    %232 = arith.mulf %225, %208 : vector<1x32xf32>
    %233 = arith.mulf %224, %231 : vector<1x32xf32>
    %234 = arith.addf %232, %233 : vector<1x32xf32>
    %235 = math.tanh %234 : vector<1x32xf32>
    %236 = arith.mulf %226, %235 : vector<1x32xf32>
    %237 = arith.truncf %236 : vector<1x32xf32> to vector<1x32xbf16>
    %c0_68 = arith.constant 0 : index
    %c0_69 = arith.constant 0 : index
    %238 = vector.load %arg19[%c0_68, %c0_69] : memref<8x32xbf16, #tpu.memory_space<vmem>>, vector<1x32xbf16>
    tpu.vector_store %arg19[%c0_68, %c0_69], %237 {strides = array<i32>} : memref<8x32xbf16, #tpu.memory_space<vmem>>, vector<1x32xbf16>,
    %239 = vector.extract_strided_slice %213 {offsets = [1, 0], sizes = [1, 128], strides = [1, 1]} : vector<8x128xf32> to vector<1x128xf32>
    %240 = arith.truncf %236 : vector<1x32xf32> to vector<1x32xbf16>
    %cst_70 = arith.constant dense<0.000000e+00> : vector<1x128xf32>
    %241 = tpu.matmul %240, %214, %cst_70 {dimension_numbers = #tpu.dot_dimension_numbers<[1], [0], [0], [1], [0, 0, 1, 1], [], []>} : vector<1x32xbf16>, vector<32x128xbf16>, vector<1x128xf32> -> vector<1x128xf32>
    %242 = arith.addf %239, %241 : vector<1x128xf32>
    %243 = arith.negf %242 : vector<1x128xf32>
    %244 = math.exp %243 : vector<1x128xf32>
    %cst_71 = arith.constant 1.000000e+00 : f32
    %245 = vector.broadcast %cst_71 : f32 to vector<1x128xf32>
    %246 = arith.addf %245, %244 : vector<1x128xf32>
    %247 = arith.divf %245, %246 : vector<1x128xf32>
    %248 = vector.extract_strided_slice %247 {offsets = [0, 0], sizes = [1, 32], strides = [1, 1]} : vector<1x128xf32> to vector<1x32xf32>
    %249 = vector.extract_strided_slice %247 {offsets = [0, 32], sizes = [1, 32], strides = [1, 1]} : vector<1x128xf32> to vector<1x32xf32>
    %250 = vector.extract_strided_slice %247 {offsets = [0, 64], sizes = [1, 32], strides = [1, 1]} : vector<1x128xf32> to vector<1x32xf32>
    %251 = vector.extract_strided_slice %247 {offsets = [0, 96], sizes = [1, 32], strides = [1, 1]} : vector<1x128xf32> to vector<1x32xf32>
    %cst_72 = arith.constant 2.000000e+00 : f32
    %252 = vector.broadcast %cst_72 : f32 to vector<1x32xf32>
    %253 = arith.mulf %252, %251 : vector<1x32xf32>
    %cst_73 = arith.constant 1.000000e+00 : f32
    %254 = vector.broadcast %cst_73 : f32 to vector<1x32xf32>
    %255 = arith.subf %253, %254 : vector<1x32xf32>
    %256 = arith.mulf %249, %234 : vector<1x32xf32>
    %257 = arith.mulf %248, %255 : vector<1x32xf32>
    %258 = arith.addf %256, %257 : vector<1x32xf32>
    %259 = math.tanh %258 : vector<1x32xf32>
    %260 = arith.mulf %250, %259 : vector<1x32xf32>
    %261 = arith.truncf %260 : vector<1x32xf32> to vector<1x32xbf16>
    %c1_74 = arith.constant 1 : index
    %c0_75 = arith.constant 0 : index
    %262 = vector.load %arg19[%c1_74, %c0_75] : memref<8x32xbf16, #tpu.memory_space<vmem>>, vector<1x32xbf16>
    tpu.vector_store %arg19[%c1_74, %c0_75], %261 {strides = array<i32>} : memref<8x32xbf16, #tpu.memory_space<vmem>>, vector<1x32xbf16>,
    %263 = vector.extract_strided_slice %213 {offsets = [2, 0], sizes = [1, 128], strides = [1, 1]} : vector<8x128xf32> to vector<1x128xf32>
    %264 = arith.truncf %260 : vector<1x32xf32> to vector<1x32xbf16>
    %cst_76 = arith.constant dense<0.000000e+00> : vector<1x128xf32>
    %265 = tpu.matmul %264, %214, %cst_76 {dimension_numbers = #tpu.dot_dimension_numbers<[1], [0], [0], [1], [0, 0, 1, 1], [], []>} : vector<1x32xbf16>, vector<32x128xbf16>, vector<1x128xf32> -> vector<1x128xf32>
    %266 = arith.addf %263, %265 : vector<1x128xf32>
    %267 = arith.negf %266 : vector<1x128xf32>
    %268 = math.exp %267 : vector<1x128xf32>
    %cst_77 = arith.constant 1.000000e+00 : f32
    %269 = vector.broadcast %cst_77 : f32 to vector<1x128xf32>
    %270 = arith.addf %269, %268 : vector<1x128xf32>
    %271 = arith.divf %269, %270 : vector<1x128xf32>
    %272 = vector.extract_strided_slice %271 {offsets = [0, 0], sizes = [1, 32], strides = [1, 1]} : vector<1x128xf32> to vector<1x32xf32>
    %273 = vector.extract_strided_slice %271 {offsets = [0, 32], sizes = [1, 32], strides = [1, 1]} : vector<1x128xf32> to vector<1x32xf32>
    %274 = vector.extract_strided_slice %271 {offsets = [0, 64], sizes = [1, 32], strides = [1, 1]} : vector<1x128xf32> to vector<1x32xf32>
    %275 = vector.extract_strided_slice %271 {offsets = [0, 96], sizes = [1, 32], strides = [1, 1]} : vector<1x128xf32> to vector<1x32xf32>
    %cst_78 = arith.constant 2.000000e+00 : f32
    %276 = vector.broadcast %cst_78 : f32 to vector<1x32xf32>
    %277 = arith.mulf %276, %275 : vector<1x32xf32>
    %cst_79 = arith.constant 1.000000e+00 : f32
    %278 = vector.broadcast %cst_79 : f32 to vector<1x32xf32>
    %279 = arith.subf %277, %278 : vector<1x32xf32>
    %280 = arith.mulf %273, %258 : vector<1x32xf32>
    %281 = arith.mulf %272, %279 : vector<1x32xf32>
    %282 = arith.addf %280, %281 : vector<1x32xf32>
    %283 = math.tanh %282 : vector<1x32xf32>
    %284 = arith.mulf %274, %283 : vector<1x32xf32>
    %285 = arith.truncf %284 : vector<1x32xf32> to vector<1x32xbf16>
    %c2_80 = arith.constant 2 : index
    %c0_81 = arith.constant 0 : index
    %286 = vector.load %arg19[%c2_80, %c0_81] : memref<8x32xbf16, #tpu.memory_space<vmem>>, vector<1x32xbf16>
    tpu.vector_store %arg19[%c2_80, %c0_81], %285 {strides = array<i32>} : memref<8x32xbf16, #tpu.memory_space<vmem>>, vector<1x32xbf16>,
    %287 = vector.extract_strided_slice %213 {offsets = [3, 0], sizes = [1, 128], strides = [1, 1]} : vector<8x128xf32> to vector<1x128xf32>
    %288 = arith.truncf %284 : vector<1x32xf32> to vector<1x32xbf16>
    %cst_82 = arith.constant dense<0.000000e+00> : vector<1x128xf32>
    %289 = tpu.matmul %288, %214, %cst_82 {dimension_numbers = #tpu.dot_dimension_numbers<[1], [0], [0], [1], [0, 0, 1, 1], [], []>} : vector<1x32xbf16>, vector<32x128xbf16>, vector<1x128xf32> -> vector<1x128xf32>
    %290 = arith.addf %287, %289 : vector<1x128xf32>
    %291 = arith.negf %290 : vector<1x128xf32>
    %292 = math.exp %291 : vector<1x128xf32>
    %cst_83 = arith.constant 1.000000e+00 : f32
    %293 = vector.broadcast %cst_83 : f32 to vector<1x128xf32>
    %294 = arith.addf %293, %292 : vector<1x128xf32>
    %295 = arith.divf %293, %294 : vector<1x128xf32>
    %296 = vector.extract_strided_slice %295 {offsets = [0, 0], sizes = [1, 32], strides = [1, 1]} : vector<1x128xf32> to vector<1x32xf32>
    %297 = vector.extract_strided_slice %295 {offsets = [0, 32], sizes = [1, 32], strides = [1, 1]} : vector<1x128xf32> to vector<1x32xf32>
    %298 = vector.extract_strided_slice %295 {offsets = [0, 64], sizes = [1, 32], strides = [1, 1]} : vector<1x128xf32> to vector<1x32xf32>
    %299 = vector.extract_strided_slice %295 {offsets = [0, 96], sizes = [1, 32], strides = [1, 1]} : vector<1x128xf32> to vector<1x32xf32>
    %cst_84 = arith.constant 2.000000e+00 : f32
    %300 = vector.broadcast %cst_84 : f32 to vector<1x32xf32>
    %301 = arith.mulf %300, %299 : vector<1x32xf32>
    %cst_85 = arith.constant 1.000000e+00 : f32
    %302 = vector.broadcast %cst_85 : f32 to vector<1x32xf32>
    %303 = arith.subf %301, %302 : vector<1x32xf32>
    %304 = arith.mulf %297, %282 : vector<1x32xf32>
    %305 = arith.mulf %296, %303 : vector<1x32xf32>
    %306 = arith.addf %304, %305 : vector<1x32xf32>
    %307 = math.tanh %306 : vector<1x32xf32>
    %308 = arith.mulf %298, %307 : vector<1x32xf32>
    %309 = arith.truncf %308 : vector<1x32xf32> to vector<1x32xbf16>
    %c3_86 = arith.constant 3 : index
    %c0_87 = arith.constant 0 : index
    %310 = vector.load %arg19[%c3_86, %c0_87] : memref<8x32xbf16, #tpu.memory_space<vmem>>, vector<1x32xbf16>
    tpu.vector_store %arg19[%c3_86, %c0_87], %309 {strides = array<i32>} : memref<8x32xbf16, #tpu.memory_space<vmem>>, vector<1x32xbf16>,
    %311 = vector.extract_strided_slice %213 {offsets = [4, 0], sizes = [1, 128], strides = [1, 1]} : vector<8x128xf32> to vector<1x128xf32>
    %312 = arith.truncf %308 : vector<1x32xf32> to vector<1x32xbf16>
    %cst_88 = arith.constant dense<0.000000e+00> : vector<1x128xf32>
    %313 = tpu.matmul %312, %214, %cst_88 {dimension_numbers = #tpu.dot_dimension_numbers<[1], [0], [0], [1], [0, 0, 1, 1], [], []>} : vector<1x32xbf16>, vector<32x128xbf16>, vector<1x128xf32> -> vector<1x128xf32>
    %314 = arith.addf %311, %313 : vector<1x128xf32>
    %315 = arith.negf %314 : vector<1x128xf32>
    %316 = math.exp %315 : vector<1x128xf32>
    %cst_89 = arith.constant 1.000000e+00 : f32
    %317 = vector.broadcast %cst_89 : f32 to vector<1x128xf32>
    %318 = arith.addf %317, %316 : vector<1x128xf32>
    %319 = arith.divf %317, %318 : vector<1x128xf32>
    %320 = vector.extract_strided_slice %319 {offsets = [0, 0], sizes = [1, 32], strides = [1, 1]} : vector<1x128xf32> to vector<1x32xf32>
    %321 = vector.extract_strided_slice %319 {offsets = [0, 32], sizes = [1, 32], strides = [1, 1]} : vector<1x128xf32> to vector<1x32xf32>
    %322 = vector.extract_strided_slice %319 {offsets = [0, 64], sizes = [1, 32], strides = [1, 1]} : vector<1x128xf32> to vector<1x32xf32>
    %323 = vector.extract_strided_slice %319 {offsets = [0, 96], sizes = [1, 32], strides = [1, 1]} : vector<1x128xf32> to vector<1x32xf32>
    %cst_90 = arith.constant 2.000000e+00 : f32
    %324 = vector.broadcast %cst_90 : f32 to vector<1x32xf32>
    %325 = arith.mulf %324, %323 : vector<1x32xf32>
    %cst_91 = arith.constant 1.000000e+00 : f32
    %326 = vector.broadcast %cst_91 : f32 to vector<1x32xf32>
    %327 = arith.subf %325, %326 : vector<1x32xf32>
    %328 = arith.mulf %321, %306 : vector<1x32xf32>
    %329 = arith.mulf %320, %327 : vector<1x32xf32>
    %330 = arith.addf %328, %329 : vector<1x32xf32>
    %331 = math.tanh %330 : vector<1x32xf32>
    %332 = arith.mulf %322, %331 : vector<1x32xf32>
    %333 = arith.truncf %332 : vector<1x32xf32> to vector<1x32xbf16>
    %c4_92 = arith.constant 4 : index
    %c0_93 = arith.constant 0 : index
    %334 = vector.load %arg19[%c4_92, %c0_93] : memref<8x32xbf16, #tpu.memory_space<vmem>>, vector<1x32xbf16>
    tpu.vector_store %arg19[%c4_92, %c0_93], %333 {strides = array<i32>} : memref<8x32xbf16, #tpu.memory_space<vmem>>, vector<1x32xbf16>,
    %335 = vector.extract_strided_slice %213 {offsets = [5, 0], sizes = [1, 128], strides = [1, 1]} : vector<8x128xf32> to vector<1x128xf32>
    %336 = arith.truncf %332 : vector<1x32xf32> to vector<1x32xbf16>
    %cst_94 = arith.constant dense<0.000000e+00> : vector<1x128xf32>
    %337 = tpu.matmul %336, %214, %cst_94 {dimension_numbers = #tpu.dot_dimension_numbers<[1], [0], [0], [1], [0, 0, 1, 1], [], []>} : vector<1x32xbf16>, vector<32x128xbf16>, vector<1x128xf32> -> vector<1x128xf32>
    %338 = arith.addf %335, %337 : vector<1x128xf32>
    %339 = arith.negf %338 : vector<1x128xf32>
    %340 = math.exp %339 : vector<1x128xf32>
    %cst_95 = arith.constant 1.000000e+00 : f32
    %341 = vector.broadcast %cst_95 : f32 to vector<1x128xf32>
    %342 = arith.addf %341, %340 : vector<1x128xf32>
    %343 = arith.divf %341, %342 : vector<1x128xf32>
    %344 = vector.extract_strided_slice %343 {offsets = [0, 0], sizes = [1, 32], strides = [1, 1]} : vector<1x128xf32> to vector<1x32xf32>
    %345 = vector.extract_strided_slice %343 {offsets = [0, 32], sizes = [1, 32], strides = [1, 1]} : vector<1x128xf32> to vector<1x32xf32>
    %346 = vector.extract_strided_slice %343 {offsets = [0, 64], sizes = [1, 32], strides = [1, 1]} : vector<1x128xf32> to vector<1x32xf32>
    %347 = vector.extract_strided_slice %343 {offsets = [0, 96], sizes = [1, 32], strides = [1, 1]} : vector<1x128xf32> to vector<1x32xf32>
    %cst_96 = arith.constant 2.000000e+00 : f32
    %348 = vector.broadcast %cst_96 : f32 to vector<1x32xf32>
    %349 = arith.mulf %348, %347 : vector<1x32xf32>
    %cst_97 = arith.constant 1.000000e+00 : f32
    %350 = vector.broadcast %cst_97 : f32 to vector<1x32xf32>
    %351 = arith.subf %349, %350 : vector<1x32xf32>
    %352 = arith.mulf %345, %330 : vector<1x32xf32>
    %353 = arith.mulf %344, %351 : vector<1x32xf32>
    %354 = arith.addf %352, %353 : vector<1x32xf32>
    %355 = math.tanh %354 : vector<1x32xf32>
    %356 = arith.mulf %346, %355 : vector<1x32xf32>
    %357 = arith.truncf %356 : vector<1x32xf32> to vector<1x32xbf16>
    %c5_98 = arith.constant 5 : index
    %c0_99 = arith.constant 0 : index
    %358 = vector.load %arg19[%c5_98, %c0_99] : memref<8x32xbf16, #tpu.memory_space<vmem>>, vector<1x32xbf16>
    tpu.vector_store %arg19[%c5_98, %c0_99], %357 {strides = array<i32>} : memref<8x32xbf16, #tpu.memory_space<vmem>>, vector<1x32xbf16>,
    %359 = vector.extract_strided_slice %213 {offsets = [6, 0], sizes = [1, 128], strides = [1, 1]} : vector<8x128xf32> to vector<1x128xf32>
    %360 = arith.truncf %356 : vector<1x32xf32> to vector<1x32xbf16>
    %cst_100 = arith.constant dense<0.000000e+00> : vector<1x128xf32>
    %361 = tpu.matmul %360, %214, %cst_100 {dimension_numbers = #tpu.dot_dimension_numbers<[1], [0], [0], [1], [0, 0, 1, 1], [], []>} : vector<1x32xbf16>, vector<32x128xbf16>, vector<1x128xf32> -> vector<1x128xf32>
    %362 = arith.addf %359, %361 : vector<1x128xf32>
    %363 = arith.negf %362 : vector<1x128xf32>
    %364 = math.exp %363 : vector<1x128xf32>
    %cst_101 = arith.constant 1.000000e+00 : f32
    %365 = vector.broadcast %cst_101 : f32 to vector<1x128xf32>
    %366 = arith.addf %365, %364 : vector<1x128xf32>
    %367 = arith.divf %365, %366 : vector<1x128xf32>
    %368 = vector.extract_strided_slice %367 {offsets = [0, 0], sizes = [1, 32], strides = [1, 1]} : vector<1x128xf32> to vector<1x32xf32>
    %369 = vector.extract_strided_slice %367 {offsets = [0, 32], sizes = [1, 32], strides = [1, 1]} : vector<1x128xf32> to vector<1x32xf32>
    %370 = vector.extract_strided_slice %367 {offsets = [0, 64], sizes = [1, 32], strides = [1, 1]} : vector<1x128xf32> to vector<1x32xf32>
    %371 = vector.extract_strided_slice %367 {offsets = [0, 96], sizes = [1, 32], strides = [1, 1]} : vector<1x128xf32> to vector<1x32xf32>
    %cst_102 = arith.constant 2.000000e+00 : f32
    %372 = vector.broadcast %cst_102 : f32 to vector<1x32xf32>
    %373 = arith.mulf %372, %371 : vector<1x32xf32>
    %cst_103 = arith.constant 1.000000e+00 : f32
    %374 = vector.broadcast %cst_103 : f32 to vector<1x32xf32>
    %375 = arith.subf %373, %374 : vector<1x32xf32>
    %376 = arith.mulf %369, %354 : vector<1x32xf32>
    %377 = arith.mulf %368, %375 : vector<1x32xf32>
    %378 = arith.addf %376, %377 : vector<1x32xf32>
    %379 = math.tanh %378 : vector<1x32xf32>
    %380 = arith.mulf %370, %379 : vector<1x32xf32>
    %381 = arith.truncf %380 : vector<1x32xf32> to vector<1x32xbf16>
    %c6_104 = arith.constant 6 : index
    %c0_105 = arith.constant 0 : index
    %382 = vector.load %arg19[%c6_104, %c0_105] : memref<8x32xbf16, #tpu.memory_space<vmem>>, vector<1x32xbf16>
    tpu.vector_store %arg19[%c6_104, %c0_105], %381 {strides = array<i32>} : memref<8x32xbf16, #tpu.memory_space<vmem>>, vector<1x32xbf16>,
    %383 = vector.extract_strided_slice %213 {offsets = [7, 0], sizes = [1, 128], strides = [1, 1]} : vector<8x128xf32> to vector<1x128xf32>
    %384 = arith.truncf %380 : vector<1x32xf32> to vector<1x32xbf16>
    %cst_106 = arith.constant dense<0.000000e+00> : vector<1x128xf32>
    %385 = tpu.matmul %384, %214, %cst_106 {dimension_numbers = #tpu.dot_dimension_numbers<[1], [0], [0], [1], [0, 0, 1, 1], [], []>} : vector<1x32xbf16>, vector<32x128xbf16>, vector<1x128xf32> -> vector<1x128xf32>
    %386 = arith.addf %383, %385 : vector<1x128xf32>
    %387 = arith.negf %386 : vector<1x128xf32>
    %388 = math.exp %387 : vector<1x128xf32>
    %cst_107 = arith.constant 1.000000e+00 : f32
    %389 = vector.broadcast %cst_107 : f32 to vector<1x128xf32>
    %390 = arith.addf %389, %388 : vector<1x128xf32>
    %391 = arith.divf %389, %390 : vector<1x128xf32>
    %392 = vector.extract_strided_slice %391 {offsets = [0, 0], sizes = [1, 32], strides = [1, 1]} : vector<1x128xf32> to vector<1x32xf32>
    %393 = vector.extract_strided_slice %391 {offsets = [0, 32], sizes = [1, 32], strides = [1, 1]} : vector<1x128xf32> to vector<1x32xf32>
    %394 = vector.extract_strided_slice %391 {offsets = [0, 64], sizes = [1, 32], strides = [1, 1]} : vector<1x128xf32> to vector<1x32xf32>
    %395 = vector.extract_strided_slice %391 {offsets = [0, 96], sizes = [1, 32], strides = [1, 1]} : vector<1x128xf32> to vector<1x32xf32>
    %cst_108 = arith.constant 2.000000e+00 : f32
    %396 = vector.broadcast %cst_108 : f32 to vector<1x32xf32>
    %397 = arith.mulf %396, %395 : vector<1x32xf32>
    %cst_109 = arith.constant 1.000000e+00 : f32
    %398 = vector.broadcast %cst_109 : f32 to vector<1x32xf32>
    %399 = arith.subf %397, %398 : vector<1x32xf32>
    %400 = arith.mulf %393, %378 : vector<1x32xf32>
    %401 = arith.mulf %392, %399 : vector<1x32xf32>
    %402 = arith.addf %400, %401 : vector<1x32xf32>
    %403 = math.tanh %402 : vector<1x32xf32>
    %404 = arith.mulf %394, %403 : vector<1x32xf32>
    %405 = arith.truncf %404 : vector<1x32xf32> to vector<1x32xbf16>
    %c7_110 = arith.constant 7 : index
    %c0_111 = arith.constant 0 : index
    %406 = vector.load %arg19[%c7_110, %c0_111] : memref<8x32xbf16, #tpu.memory_space<vmem>>, vector<1x32xbf16>
    tpu.vector_store %arg19[%c7_110, %c0_111], %405 {strides = array<i32>} : memref<8x32xbf16, #tpu.memory_space<vmem>>, vector<1x32xbf16>,
    %c0_112 = arith.constant 0 : index
    %c0_113 = arith.constant 0 : index
    %407 = vector.load %arg19[%c0_112, %c0_113] : memref<8x32xbf16, #tpu.memory_space<vmem>>, vector<8x32xbf16>
    %c0_114 = arith.constant 0 : index
    %c0_115 = arith.constant 0 : index
    %c0_116 = arith.constant 0 : index
    %408 = vector.load %arg3[%c0_114, %c0_115, %c0_116] : memref<1x10x32xbf16, #tpu.memory_space<vmem>>, vector<1x10x32xbf16>
    %409 = vector.shape_cast %408 : vector<1x10x32xbf16> to vector<10x32xbf16>
    %c0_117 = arith.constant 0 : index
    %c0_118 = arith.constant 0 : index
    %c0_119 = arith.constant 0 : index
    %410 = vector.load %arg4[%c0_117, %c0_118, %c0_119] : memref<1x32x10xbf16, #tpu.memory_space<vmem>>, vector<1x32x10xbf16>
    %411 = vector.shape_cast %410 : vector<1x32x10xbf16> to vector<32x10xbf16>
    %cst_120 = arith.constant dense<0.000000e+00> : vector<8x10xf32>
    %412 = tpu.matmul %407, %411, %cst_120 {dimension_numbers = #tpu.dot_dimension_numbers<[1], [0], [0], [1], [0, 0, 1, 1], [], []>} : vector<8x32xbf16>, vector<32x10xbf16>, vector<8x10xf32> -> vector<8x10xf32>
    %cst_121 = arith.constant 0.176776692 : f32
    %413 = vector.broadcast %cst_121 : f32 to vector<8x10xf32>
    %414 = arith.mulf %412, %413 : vector<8x10xf32>
    %c0_122 = arith.constant 0 : index
    %c0_123 = arith.constant 0 : index
    %c0_124 = arith.constant 0 : index
    %415 = vector.load %arg2[%c0_122, %c0_123, %c0_124] : memref<1x1x10xf32, #tpu.memory_space<vmem>>, vector<1x1x10xf32>
    %416 = vector.shape_cast %415 : vector<1x1x10xf32> to vector<1x10xf32>
    %417 = vector.broadcast %416 : vector<1x10xf32> to vector<8x10xf32>
    %418 = arith.addf %414, %417 : vector<8x10xf32>
    %cst_125 = arith.constant dense<0xFF800000> : vector<8xf32>
    %419 = vector.multi_reduction <maximumf>, %418, %cst_125 [1] : vector<8x10xf32> to vector<8xf32>
    %420 = vector.shape_cast %419 : vector<8xf32> to vector<8x1xf32>
    %421 = vector.broadcast %420 : vector<8x1xf32> to vector<8x10xf32>
    %422 = arith.subf %418, %421 : vector<8x10xf32>
    %423 = math.exp %422 : vector<8x10xf32>
    %cst_126 = arith.constant dense<0.000000e+00> : vector<8xf32>
    %424 = vector.multi_reduction <add>, %423, %cst_126 [1] : vector<8x10xf32> to vector<8xf32>
    %425 = vector.shape_cast %424 : vector<8xf32> to vector<8x1xf32>
    %426 = tpu.reciprocal %425 : vector<8x1xf32> -> vector<8x1xf32>
    %427 = vector.broadcast %426 : vector<8x1xf32> to vector<8x10xf32>
    %428 = arith.mulf %423, %427 : vector<8x10xf32>
    %429 = arith.truncf %428 : vector<8x10xf32> to vector<8x10xbf16>
    %cst_127 = arith.constant dense<0.000000e+00> : vector<8x32xf32>
    %430 = tpu.matmul %429, %409, %cst_127 {dimension_numbers = #tpu.dot_dimension_numbers<[1], [0], [0], [1], [0, 0, 1, 1], [], []>} : vector<8x10xbf16>, vector<10x32xbf16>, vector<8x32xf32> -> vector<8x32xf32>
    %431 = arith.truncf %430 : vector<8x32xf32> to vector<8x32xbf16>
    %432 = tpu.concatenate %431, %407 in 1 : vector<8x32xbf16>, vector<8x32xbf16> -> vector<8x64xbf16>
    %c0_128 = arith.constant 0 : index
    %c0_129 = arith.constant 0 : index
    %433 = vector.load %arg13[%c0_128, %c0_129] : memref<64x32xbf16, #tpu.memory_space<vmem>>, vector<64x32xbf16>
    %cst_130 = arith.constant dense<0.000000e+00> : vector<8x32xf32>
    %434 = tpu.matmul %432, %433, %cst_130 {dimension_numbers = #tpu.dot_dimension_numbers<[1], [0], [0], [1], [0, 0, 1, 1], [], []>} : vector<8x64xbf16>, vector<64x32xbf16>, vector<8x32xf32> -> vector<8x32xf32>
    %c0_131 = arith.constant 0 : index
    %c0_132 = arith.constant 0 : index
    %435 = vector.load %arg14[%c0_131, %c0_132] : memref<1x32xf32, #tpu.memory_space<vmem>>, vector<1x32xf32>
    %436 = vector.broadcast %435 : vector<1x32xf32> to vector<8x32xf32>
    %437 = arith.addf %434, %436 : vector<8x32xf32>
    %438 = math.tanh %437 : vector<8x32xf32>
    %439 = arith.truncf %438 : vector<8x32xf32> to vector<8x32xbf16>
    %c0_133 = arith.constant 0 : index
    %c0_134 = arith.constant 0 : index
    %440 = vector.load %arg15[%c0_133, %c0_134] : memref<32x128xbf16, #tpu.memory_space<vmem>>, vector<32x128xbf16>
    %cst_135 = arith.constant dense<0.000000e+00> : vector<8x128xf32>
    %441 = tpu.matmul %439, %440, %cst_135 {dimension_numbers = #tpu.dot_dimension_numbers<[1], [0], [0], [1], [0, 0, 1, 1], [], []>} : vector<8x32xbf16>, vector<32x128xbf16>, vector<8x128xf32> -> vector<8x128xf32>
    %c0_136 = arith.constant 0 : index
    %c0_137 = arith.constant 0 : index
    %442 = vector.load %arg16[%c0_136, %c0_137] : memref<1x128xf32, #tpu.memory_space<vmem>>, vector<1x128xf32>
    %443 = vector.broadcast %442 : vector<1x128xf32> to vector<8x128xf32>
    %444 = arith.addf %441, %443 : vector<8x128xf32>
    %c0_138 = arith.constant 0 : index
    %c0_139 = arith.constant 0 : index
    %c0_140 = arith.constant 0 : index
    %445 = vector.load %arg17[%c0_138, %c0_139, %c0_140] : memref<1x8x128xf32, #tpu.memory_space<vmem>>, vector<1x8x128xf32>
    %446 = vector.shape_cast %445 : vector<1x8x128xf32> to vector<8x128xf32>
    %447 = vector.shape_cast %444 : vector<8x128xf32> to vector<1x8x128xf32>
    tpu.vector_store %arg17[%c0_138, %c0_139, %c0_140], %447 {strides = array<i32>} : memref<1x8x128xf32, #tpu.memory_space<vmem>>, vector<1x8x128xf32>,
    return
  }
  func.func @transform_0(%arg0: i32) -> (i32, i32, i32) {
    %c0_i32 = arith.constant 0 : i32
    %c0_i32_0 = arith.constant 0 : i32
    %c0_i32_1 = arith.constant 0 : i32
    return %arg0, %c0_i32, %c0_i32_0 : i32, i32, i32
  }
  func.func @transform_1(%arg0: i32) -> (i32, i32, i32) {
    %c0_i32 = arith.constant 0 : i32
    %c0_i32_0 = arith.constant 0 : i32
    %c0_i32_1 = arith.constant 0 : i32
    return %arg0, %c0_i32, %c0_i32_0 : i32, i32, i32
  }
  func.func @transform_2(%arg0: i32) -> (i32, i32, i32) {
    %c0_i32 = arith.constant 0 : i32
    %c0_i32_0 = arith.constant 0 : i32
    %c0_i32_1 = arith.constant 0 : i32
    return %arg0, %c0_i32, %c0_i32_0 : i32, i32, i32
  }
  func.func @transform_3(%arg0: i32) -> (i32, i32, i32) {
    %c0_i32 = arith.constant 0 : i32
    %c0_i32_0 = arith.constant 0 : i32
    %c0_i32_1 = arith.constant 0 : i32
    return %arg0, %c0_i32, %c0_i32_0 : i32, i32, i32
  }
  func.func @transform_4(%arg0: i32) -> (i32, i32, i32) {
    %c0_i32 = arith.constant 0 : i32
    %c0_i32_0 = arith.constant 0 : i32
    %c0_i32_1 = arith.constant 0 : i32
    return %arg0, %c0_i32, %c0_i32_0 : i32, i32, i32
  }
  func.func @transform_5(%arg0: i32) -> (i32, i32, i32) {
    %c0_i32 = arith.constant 0 : i32
    %c0_i32_0 = arith.constant 0 : i32
    %c0_i32_1 = arith.constant 0 : i32
    return %arg0, %c0_i32, %c0_i32_0 : i32, i32, i32
  }
  func.func @transform_6(%arg0: i32) -> (i32, i32) {
    %c0_i32 = arith.constant 0 : i32
    %c0_i32_0 = arith.constant 0 : i32
    %c0_i32_1 = arith.constant 0 : i32
    return %c0_i32, %c0_i32_0 : i32, i32
  }
  func.func @transform_7(%arg0: i32) -> (i32, i32) {
    %c0_i32 = arith.constant 0 : i32
    %c0_i32_0 = arith.constant 0 : i32
    %c0_i32_1 = arith.constant 0 : i32
    return %c0_i32, %c0_i32_0 : i32, i32
  }
  func.func @transform_8(%arg0: i32) -> (i32, i32) {
    %c0_i32 = arith.constant 0 : i32
    %c0_i32_0 = arith.constant 0 : i32
    %c0_i32_1 = arith.constant 0 : i32
    return %c0_i32, %c0_i32_0 : i32, i32
  }
  func.func @transform_9(%arg0: i32) -> (i32, i32) {
    %c0_i32 = arith.constant 0 : i32
    %c0_i32_0 = arith.constant 0 : i32
    %c0_i32_1 = arith.constant 0 : i32
    return %c0_i32, %c0_i32_0 : i32, i32
  }
  func.func @transform_10(%arg0: i32) -> (i32, i32) {
    %c0_i32 = arith.constant 0 : i32
    %c0_i32_0 = arith.constant 0 : i32
    %c0_i32_1 = arith.constant 0 : i32
    return %c0_i32, %c0_i32_0 : i32, i32
  }
  func.func @transform_11(%arg0: i32) -> (i32, i32) {
    %c0_i32 = arith.constant 0 : i32
    %c0_i32_0 = arith.constant 0 : i32
    %c0_i32_1 = arith.constant 0 : i32
    return %c0_i32, %c0_i32_0 : i32, i32
  }
  func.func @transform_12(%arg0: i32) -> (i32, i32) {
    %c0_i32 = arith.constant 0 : i32
    %c0_i32_0 = arith.constant 0 : i32
    %c0_i32_1 = arith.constant 0 : i32
    return %c0_i32, %c0_i32_0 : i32, i32
  }
  func.func @transform_13(%arg0: i32) -> (i32, i32) {
    %c0_i32 = arith.constant 0 : i32
    %c0_i32_0 = arith.constant 0 : i32
    %c0_i32_1 = arith.constant 0 : i32
    return %c0_i32, %c0_i32_0 : i32, i32
  }
  func.func @transform_14(%arg0: i32) -> (i32, i32) {
    %c0_i32 = arith.constant 0 : i32
    %c0_i32_0 = arith.constant 0 : i32
    %c0_i32_1 = arith.constant 0 : i32
    return %c0_i32, %c0_i32_0 : i32, i32
  }
  func.func @transform_15(%arg0: i32) -> (i32, i32) {
    %c0_i32 = arith.constant 0 : i32
    %c0_i32_0 = arith.constant 0 : i32
    %c0_i32_1 = arith.constant 0 : i32
    return %c0_i32, %c0_i32_0 : i32, i32
  }
  func.func @transform_16(%arg0: i32) -> (i32, i32, i32) {
    %c0_i32 = arith.constant 0 : i32
    %c0_i32_0 = arith.constant 0 : i32
    %c0_i32_1 = arith.constant 0 : i32
    return %arg0, %c0_i32, %c0_i32_0 : i32, i32, i32
  }
}

</mosaic_0001>

<llo_original>
// kernel: tpu_custom_call.1
$region0: #{tpu_custom_call.1}
  #allocation0 [shape = 'u32[]', space=smem, size = 0x4, offset = 0x4, fixed_abs, tag = 'smem constant byte address 0x4 - core index']
  #allocation1 [shape = 'u32[72,128]{1,0:T(1,128)}', space=vmem, size = 0x9000, scoped, tag = 'internal scratch']
  #allocation2 [shape = 'bf16[8,32]{1,0:T(8,128)(2,1)}', space=vmem, size = 0x800, scoped, tag = 'scratch operand']
  #allocation3 [shape = 'bf16[8,32]{1,0:T(8,128)(2,1)}', space=vmem, size = 0x800, scoped, tag = 'scratch operand']
  %s0 = inlined_call_operand.vmem [shape: bf16[2,8,16], index: 0, kind: input, shape index: {}]
  %s1 = inlined_call_operand.vmem [shape: f32[2,1,10], index: 1, kind: input, shape index: {}]
  %s2 = inlined_call_operand.vmem [shape: bf16[2,10,32], index: 2, kind: input, shape index: {}]
  %s3 = inlined_call_operand.vmem [shape: bf16[2,32,10], index: 3, kind: input, shape index: {}]
  %s4 = inlined_call_operand.vmem [shape: f32[2,2,32], index: 4, kind: input, shape index: {}]
  %s5 = inlined_call_operand.vmem [shape: f32[2,2,32], index: 5, kind: input, shape index: {}]
  %s6 = inlined_call_operand.vmem [shape: bf16[16,128], index: 6, kind: input, shape index: {}]
  %s7 = inlined_call_operand.vmem [shape: bf16[32,128], index: 7, kind: input, shape index: {}]
  %s8 = inlined_call_operand.vmem [shape: f32[1,128], index: 8, kind: input, shape index: {}]
  %s9 = inlined_call_operand.vmem [shape: bf16[32,128], index: 9, kind: input, shape index: {}]
  %s10 = inlined_call_operand.vmem [shape: bf16[32,128], index: 10, kind: input, shape index: {}]
  %s11 = inlined_call_operand.vmem [shape: f32[1,128], index: 11, kind: input, shape index: {}]
  %s12 = inlined_call_operand.vmem [shape: bf16[64,32], index: 12, kind: input, shape index: {}]
  %s13 = inlined_call_operand.vmem [shape: f32[1,32], index: 13, kind: input, shape index: {}]
  %s14 = inlined_call_operand.vmem [shape: bf16[32,128], index: 14, kind: input, shape index: {}]
  %s15 = inlined_call_operand.vmem [shape: f32[1,128], index: 15, kind: input, shape index: {}]
  %s16 = inlined_call_operand.hbm [shape: f32[2,8,128], index: 16, kind: output, shape index: {}]
  %s17 = sld [smem:[#allocation0]]
  $region97: #{tpu_custom_call.1} parent=0
    _
  %s19 = ssub.s32 1, %s17
  %s20 = scalar_select 0, %s19, %s17
  $region1: #{tpu_custom_call.1} parent=0
    #allocation4 [shape = 'u8[8192]{0}', space=vmem, size = 0x2000, scoped, tag = 'output window, operand 0']
    #allocation5 [shape = 's32[2]{0}', space=sflag, size = 0x8, scoped, tag = 'scoped memory for tpu_custom_call.1']
    %21 = vsyncpa [#allocation5], 0
    %s22 = scalar_lea.sflag [#allocation5], 1
    %23 = vsyncpa %s22, 0
    loop: start=0, step=1, limit=4
    $region2: #{tpu_custom_call.1} parent=1 // loop_pre_header
      _
    $region3: #{tpu_custom_call.1} parent=1 // loop_header
      %s25 = sphi 0, %s29
      %p26 = scmp.ge.s32.totalorder %s25, 4
      %s35 = sphi 0, %s37
      %s38 = sphi 0, %s35
      %s39 = sphi 0, %s38
      %s55 = sphi 0, %s39
      %s61 = sphi 0, %s63
      %s64 = sphi 0, %s61
      %s65 = sphi 0, %s64
      %s81 = sphi 0, %s65
      %s87 = sphi 0, %s89
      %s90 = sphi 0, %s87
      %s91 = sphi 0, %s90
      %s107 = sphi 0, %s91
      %s113 = sphi 0, %s115
      %s116 = sphi 0, %s113
      %s117 = sphi 0, %s116
      %s133 = sphi 0, %s117
      %s139 = sphi 0, %s141
      %s142 = sphi 0, %s139
      %s143 = sphi 0, %s142
      %s159 = sphi 0, %s143
      %s165 = sphi 0, %s167
      %s168 = sphi 0, %s165
      %s169 = sphi 0, %s168
      %s185 = sphi 0, %s169
      %s189 = sphi 0, %s189
      %s191 = sphi 0, %s189
      %s192 = sphi 0, %s191
      %s206 = sphi 0, %s192
      %s210 = sphi 0, %s210
      %s212 = sphi 0, %s210
      %s213 = sphi 0, %s212
      %s227 = sphi 0, %s213
      %s231 = sphi 0, %s231
      %s233 = sphi 0, %s231
      %s234 = sphi 0, %s233
      %s248 = sphi 0, %s234
      %s252 = sphi 0, %s252
      %s254 = sphi 0, %s252
      %s255 = sphi 0, %s254
      %s269 = sphi 0, %s255
      %s273 = sphi 0, %s273
      %s275 = sphi 0, %s273
      %s276 = sphi 0, %s275
      %s290 = sphi 0, %s276
      %s294 = sphi 0, %s294
      %s296 = sphi 0, %s294
      %s297 = sphi 0, %s296
      %s311 = sphi 0, %s297
      %s315 = sphi 0, %s315
      %s317 = sphi 0, %s315
      %s318 = sphi 0, %s317
      %s332 = sphi 0, %s318
      %s336 = sphi 0, %s336
      %s338 = sphi 0, %s336
      %s339 = sphi 0, %s338
      %s353 = sphi 0, %s339
      %s357 = sphi 0, %s357
      %s359 = sphi 0, %s357
      %s360 = sphi 0, %s359
      %s374 = sphi 0, %s360
      %s378 = sphi 0, %s378
      %s380 = sphi 0, %s378
      %s381 = sphi 0, %s380
      %s395 = sphi 0, %s381
      %s401 = sphi 0, %s403
      %s404 = sphi 0, %s401
      %s405 = sphi 0, %s404
      %s421 = sphi 0, %s405
    $region4: #{tpu_custom_call.1} parent=1 // loop_header_branch
      %28 = sbr.rel (%p26) target = $region8
    $region5: #{tpu_custom_call.1} parent=1 // loop_body
      %s30 = ssub.s32 %s25, 1
      %s31 = ssub.s32 %s25, 2
      %s32 = sadd.s32 %s25, 1
      %s33 = ssub.s32 %s25, %s32
      %p34 = scmp.eq.s32.totalorder %s33, 0
      %s36 = sadd.s32 %s35, 1
      %s37 = scalar_select %p34, %s35, %s36
      %p40 = pneg %p34
      %p41 = scmp.eq.s32.totalorder %s25, 1
      %p42 = por %p40, %p41
      %p43 = scmp.ne.s32.totalorder %s35, %s38
      %p44 = scmp.eq.s32.totalorder %s25, 0
      %p45 = por %p43, %p44
      %p46 = scmp.ne.s32.totalorder %s35, %s38
      %p47 = scmp.eq.s32.totalorder %s30, 1
      %p48 = por %p46, %p47
      %p49 = scmp.ne.s32.totalorder %s38, %s39
      %p50 = scmp.eq.s32.totalorder %s30, 0
      %p51 = por %p49, %p50
      %p52 = scmp.ne.s32.totalorder %s38, %s39
      %p53 = scmp.eq.s32.totalorder %s31, 1
      %p54 = por %p52, %p53
      %p56 = scmp.ne.s32.totalorder %s39, %s55
      %p57 = scmp.eq.s32.totalorder %s31, 0
      %p58 = por %p56, %p57
      %s59 = ssub.s32 %s25, %s32
      %p60 = scmp.eq.s32.totalorder %s59, 0
      %s62 = sadd.s32 %s61, 1
      %s63 = scalar_select %p60, %s61, %s62
      %p66 = pneg %p60
      %p67 = scmp.eq.s32.totalorder %s25, 1
      %p68 = por %p66, %p67
      %p69 = scmp.ne.s32.totalorder %s61, %s64
      %p70 = scmp.eq.s32.totalorder %s25, 0
      %p71 = por %p69, %p70
      %p72 = scmp.ne.s32.totalorder %s61, %s64
      %p73 = scmp.eq.s32.totalorder %s30, 1
      %p74 = por %p72, %p73
      %p75 = scmp.ne.s32.totalorder %s64, %s65
      %p76 = scmp.eq.s32.totalorder %s30, 0
      %p77 = por %p75, %p76
      %p78 = scmp.ne.s32.totalorder %s64, %s65
      %p79 = scmp.eq.s32.totalorder %s31, 1
      %p80 = por %p78, %p79
      %p82 = scmp.ne.s32.totalorder %s65, %s81
      %p83 = scmp.eq.s32.totalorder %s31, 0
      %p84 = por %p82, %p83
      %s85 = ssub.s32 %s25, %s32
      %p86 = scmp.eq.s32.totalorder %s85, 0
      %s88 = sadd.s32 %s87, 1
      %s89 = scalar_select %p86, %s87, %s88
      %p92 = pneg %p86
      %p93 = scmp.eq.s32.totalorder %s25, 1
      %p94 = por %p92, %p93
      %p95 = scmp.ne.s32.totalorder %s87, %s90
      %p96 = scmp.eq.s32.totalorder %s25, 0
      %p97 = por %p95, %p96
      %p98 = scmp.ne.s32.totalorder %s87, %s90
      %p99 = scmp.eq.s32.totalorder %s30, 1
      %p100 = por %p98, %p99
      %p101 = scmp.ne.s32.totalorder %s90, %s91
      %p102 = scmp.eq.s32.totalorder %s30, 0
      %p103 = por %p101, %p102
      %p104 = scmp.ne.s32.totalorder %s90, %s91
      %p105 = scmp.eq.s32.totalorder %s31, 1
      %p106 = por %p104, %p105
      %p108 = scmp.ne.s32.totalorder %s91, %s107
      %p109 = scmp.eq.s32.totalorder %s31, 0
      %p110 = por %p108, %p109
      %s111 = ssub.s32 %s25, %s32
      %p112 = scmp.eq.s32.totalorder %s111, 0
      %s114 = sadd.s32 %s113, 1
      %s115 = scalar_select %p112, %s113, %s114
      %p118 = pneg %p112
      %p119 = scmp.eq.s32.totalorder %s25, 1
      %p120 = por %p118, %p119
      %p121 = scmp.ne.s32.totalorder %s113, %s116
      %p122 = scmp.eq.s32.totalorder %s25, 0
      %p123 = por %p121, %p122
      %p124 = scmp.ne.s32.totalorder %s113, %s116
      %p125 = scmp.eq.s32.totalorder %s30, 1
      %p126 = por %p124, %p125
      %p127 = scmp.ne.s32.totalorder %s116, %s117
      %p128 = scmp.eq.s32.totalorder %s30, 0
      %p129 = por %p127, %p128
      %p130 = scmp.ne.s32.totalorder %s116, %s117
      %p131 = scmp.eq.s32.totalorder %s31, 1
      %p132 = por %p130, %p131
      %p134 = scmp.ne.s32.totalorder %s117, %s133
      %p135 = scmp.eq.s32.totalorder %s31, 0
      %p136 = por %p134, %p135
      %s137 = ssub.s32 %s25, %s32
      %p138 = scmp.eq.s32.totalorder %s137, 0
      %s140 = sadd.s32 %s139, 1
      %s141 = scalar_select %p138, %s139, %s140
      %p144 = pneg %p138
      %p145 = scmp.eq.s32.totalorder %s25, 1
      %p146 = por %p144, %p145
      %p147 = scmp.ne.s32.totalorder %s139, %s142
      %p148 = scmp.eq.s32.totalorder %s25, 0
      %p149 = por %p147, %p148
      %p150 = scmp.ne.s32.totalorder %s139, %s142
      %p151 = scmp.eq.s32.totalorder %s30, 1
      %p152 = por %p150, %p151
      %p153 = scmp.ne.s32.totalorder %s142, %s143
      %p154 = scmp.eq.s32.totalorder %s30, 0
      %p155 = por %p153, %p154
      %p156 = scmp.ne.s32.totalorder %s142, %s143
      %p157 = scmp.eq.s32.totalorder %s31, 1
      %p158 = por %p156, %p157
      %p160 = scmp.ne.s32.totalorder %s143, %s159
      %p161 = scmp.eq.s32.totalorder %s31, 0
      %p162 = por %p160, %p161
      %s163 = ssub.s32 %s25, %s32
      %p164 = scmp.eq.s32.totalorder %s163, 0
      %s166 = sadd.s32 %s165, 1
      %s167 = scalar_select %p164, %s165, %s166
      %p170 = pneg %p164
      %p171 = scmp.eq.s32.totalorder %s25, 1
      %p172 = por %p170, %p171
      %p173 = scmp.ne.s32.totalorder %s165, %s168
      %p174 = scmp.eq.s32.totalorder %s25, 0
      %p175 = por %p173, %p174
      %p176 = scmp.ne.s32.totalorder %s165, %s168
      %p177 = scmp.eq.s32.totalorder %s30, 1
      %p178 = por %p176, %p177
      %p179 = scmp.ne.s32.totalorder %s168, %s169
      %p180 = scmp.eq.s32.totalorder %s30, 0
      %p181 = por %p179, %p180
      %p182 = scmp.ne.s32.totalorder %s168, %s169
      %p183 = scmp.eq.s32.totalorder %s31, 1
      %p184 = por %p182, %p183
      %p186 = scmp.ne.s32.totalorder %s169, %s185
      %p187 = scmp.eq.s32.totalorder %s31, 0
      %p188 = por %p186, %p187
      %s190 = sadd.s32 %s189, 1
      %p193 = scmp.eq.s32.totalorder %s25, 1
      %p194 = scmp.ne.s32.totalorder %s189, %s191
      %p195 = scmp.eq.s32.totalorder %s25, 0
      %p196 = por %p194, %p195
      %p197 = scmp.ne.s32.totalorder %s189, %s191
      %p198 = scmp.eq.s32.totalorder %s30, 1
      %p199 = por %p197, %p198
      %p200 = scmp.ne.s32.totalorder %s191, %s192
      %p201 = scmp.eq.s32.totalorder %s30, 0
      %p202 = por %p200, %p201
      %p203 = scmp.ne.s32.totalorder %s191, %s192
      %p204 = scmp.eq.s32.totalorder %s31, 1
      %p205 = por %p203, %p204
      %p207 = scmp.ne.s32.totalorder %s192, %s206
      %p208 = scmp.eq.s32.totalorder %s31, 0
      %p209 = por %p207, %p208
      %s211 = sadd.s32 %s210, 1
      %p214 = scmp.eq.s32.totalorder %s25, 1
      %p215 = scmp.ne.s32.totalorder %s210, %s212
      %p216 = scmp.eq.s32.totalorder %s25, 0
      %p217 = por %p215, %p216
      %p218 = scmp.ne.s32.totalorder %s210, %s212
      %p219 = scmp.eq.s32.totalorder %s30, 1
      %p220 = por %p218, %p219
      %p221 = scmp.ne.s32.totalorder %s212, %s213
      %p222 = scmp.eq.s32.totalorder %s30, 0
      %p223 = por %p221, %p222
      %p224 = scmp.ne.s32.totalorder %s212, %s213
      %p225 = scmp.eq.s32.totalorder %s31, 1
      %p226 = por %p224, %p225
      %p228 = scmp.ne.s32.totalorder %s213, %s227
      %p229 = scmp.eq.s32.totalorder %s31, 0
      %p230 = por %p228, %p229
      %s232 = sadd.s32 %s231, 1
      %p235 = scmp.eq.s32.totalorder %s25, 1
      %p236 = scmp.ne.s32.totalorder %s231, %s233
      %p237 = scmp.eq.s32.totalorder %s25, 0
      %p238 = por %p236, %p237
      %p239 = scmp.ne.s32.totalorder %s231, %s233
      %p240 = scmp.eq.s32.totalorder %s30, 1
      %p241 = por %p239, %p240
      %p242 = scmp.ne.s32.totalorder %s233, %s234
      %p243 = scmp.eq.s32.totalorder %s30, 0
      %p244 = por %p242, %p243
      %p245 = scmp.ne.s32.totalorder %s233, %s234
      %p246 = scmp.eq.s32.totalorder %s31, 1
      %p247 = por %p245, %p246
      %p249 = scmp.ne.s32.totalorder %s234, %s248
      %p250 = scmp.eq.s32.totalorder %s31, 0
      %p251 = por %p249, %p250
      %s253 = sadd.s32 %s252, 1
      %p256 = scmp.eq.s32.totalorder %s25, 1
      %p257 = scmp.ne.s32.totalorder %s252, %s254
      %p258 = scmp.eq.s32.totalorder %s25, 0
      %p259 = por %p257, %p258
      %p260 = scmp.ne.s32.totalorder %s252, %s254
      %p261 = scmp.eq.s32.totalorder %s30, 1
      %p262 = por %p260, %p261
      %p263 = scmp.ne.s32.totalorder %s254, %s255
      %p264 = scmp.eq.s32.totalorder %s30, 0
      %p265 = por %p263, %p264
      %p266 = scmp.ne.s32.totalorder %s254, %s255
      %p267 = scmp.eq.s32.totalorder %s31, 1
      %p268 = por %p266, %p267
      %p270 = scmp.ne.s32.totalorder %s255, %s269
      %p271 = scmp.eq.s32.totalorder %s31, 0
      %p272 = por %p270, %p271
      %s274 = sadd.s32 %s273, 1
      %p277 = scmp.eq.s32.totalorder %s25, 1
      %p278 = scmp.ne.s32.totalorder %s273, %s275
      %p279 = scmp.eq.s32.totalorder %s25, 0
      %p280 = por %p278, %p279
      %p281 = scmp.ne.s32.totalorder %s273, %s275
      %p282 = scmp.eq.s32.totalorder %s30, 1
      %p283 = por %p281, %p282
      %p284 = scmp.ne.s32.totalorder %s275, %s276
      %p285 = scmp.eq.s32.totalorder %s30, 0
      %p286 = por %p284, %p285
      %p287 = scmp.ne.s32.totalorder %s275, %s276
      %p288 = scmp.eq.s32.totalorder %s31, 1
      %p289 = por %p287, %p288
      %p291 = scmp.ne.s32.totalorder %s276, %s290
      %p292 = scmp.eq.s32.totalorder %s31, 0
      %p293 = por %p291, %p292
      %s295 = sadd.s32 %s294, 1
      %p298 = scmp.eq.s32.totalorder %s25, 1
      %p299 = scmp.ne.s32.totalorder %s294, %s296
      %p300 = scmp.eq.s32.totalorder %s25, 0
      %p301 = por %p299, %p300
      %p302 = scmp.ne.s32.totalorder %s294, %s296
      %p303 = scmp.eq.s32.totalorder %s30, 1
      %p304 = por %p302, %p303
      %p305 = scmp.ne.s32.totalorder %s296, %s297
      %p306 = scmp.eq.s32.totalorder %s30, 0
      %p307 = por %p305, %p306
      %p308 = scmp.ne.s32.totalorder %s296, %s297
      %p309 = scmp.eq.s32.totalorder %s31, 1
      %p310 = por %p308, %p309
      %p312 = scmp.ne.s32.totalorder %s297, %s311
      %p313 = scmp.eq.s32.totalorder %s31, 0
      %p314 = por %p312, %p313
      %s316 = sadd.s32 %s315, 1
      %p319 = scmp.eq.s32.totalorder %s25, 1
      %p320 = scmp.ne.s32.totalorder %s315, %s317
      %p321 = scmp.eq.s32.totalorder %s25, 0
      %p322 = por %p320, %p321
      %p323 = scmp.ne.s32.totalorder %s315, %s317
      %p324 = scmp.eq.s32.totalorder %s30, 1
      %p325 = por %p323, %p324
      %p326 = scmp.ne.s32.totalorder %s317, %s318
      %p327 = scmp.eq.s32.totalorder %s30, 0
      %p328 = por %p326, %p327
      %p329 = scmp.ne.s32.totalorder %s317, %s318
      %p330 = scmp.eq.s32.totalorder %s31, 1
      %p331 = por %p329, %p330
      %p333 = scmp.ne.s32.totalorder %s318, %s332
      %p334 = scmp.eq.s32.totalorder %s31, 0
      %p335 = por %p333, %p334
      %s337 = sadd.s32 %s336, 1
      %p340 = scmp.eq.s32.totalorder %s25, 1
      %p341 = scmp.ne.s32.totalorder %s336, %s338
      %p342 = scmp.eq.s32.totalorder %s25, 0
      %p343 = por %p341, %p342
      %p344 = scmp.ne.s32.totalorder %s336, %s338
      %p345 = scmp.eq.s32.totalorder %s30, 1
      %p346 = por %p344, %p345
      %p347 = scmp.ne.s32.totalorder %s338, %s339
      %p348 = scmp.eq.s32.totalorder %s30, 0
      %p349 = por %p347, %p348
      %p350 = scmp.ne.s32.totalorder %s338, %s339
      %p351 = scmp.eq.s32.totalorder %s31, 1
      %p352 = por %p350, %p351
      %p354 = scmp.ne.s32.totalorder %s339, %s353
      %p355 = scmp.eq.s32.totalorder %s31, 0
      %p356 = por %p354, %p355
      %s358 = sadd.s32 %s357, 1
      %p361 = scmp.eq.s32.totalorder %s25, 1
      %p362 = scmp.ne.s32.totalorder %s357, %s359
      %p363 = scmp.eq.s32.totalorder %s25, 0
      %p364 = por %p362, %p363
      %p365 = scmp.ne.s32.totalorder %s357, %s359
      %p366 = scmp.eq.s32.totalorder %s30, 1
      %p367 = por %p365, %p366
      %p368 = scmp.ne.s32.totalorder %s359, %s360
      %p369 = scmp.eq.s32.totalorder %s30, 0
      %p370 = por %p368, %p369
      %p371 = scmp.ne.s32.totalorder %s359, %s360
      %p372 = scmp.eq.s32.totalorder %s31, 1
      %p373 = por %p371, %p372
      %p375 = scmp.ne.s32.totalorder %s360, %s374
      %p376 = scmp.eq.s32.totalorder %s31, 0
      %p377 = por %p375, %p376
      %s379 = sadd.s32 %s378, 1
      %p382 = scmp.eq.s32.totalorder %s25, 1
      %p383 = scmp.ne.s32.totalorder %s378, %s380
      %p384 = scmp.eq.s32.totalorder %s25, 0
      %p385 = por %p383, %p384
      %p386 = scmp.ne.s32.totalorder %s378, %s380
      %p387 = scmp.eq.s32.totalorder %s30, 1
      %p388 = por %p386, %p387
      %p389 = scmp.ne.s32.totalorder %s380, %s381
      %p390 = scmp.eq.s32.totalorder %s30, 0
      %p391 = por %p389, %p390
      %p392 = scmp.ne.s32.totalorder %s380, %s381
      %p393 = scmp.eq.s32.totalorder %s31, 1
      %p394 = por %p392, %p393
      %p396 = scmp.ne.s32.totalorder %s381, %s395
      %p397 = scmp.eq.s32.totalorder %s31, 0
      %p398 = por %p396, %p397
      %s399 = ssub.s32 %s25, %s32
      %p400 = scmp.eq.s32.totalorder %s399, 0
      %s402 = sadd.s32 %s401, 1
      %s403 = scalar_select %p400, %s401, %s402
      %p406 = pneg %p400
      %p407 = scmp.eq.s32.totalorder %s25, 1
      %p408 = por %p406, %p407
      %p409 = scmp.ne.s32.totalorder %s401, %s404
      %p410 = scmp.eq.s32.totalorder %s25, 0
      %p411 = por %p409, %p410
      %p412 = scmp.ne.s32.totalorder %s401, %s404
      %p413 = scmp.eq.s32.totalorder %s30, 1
      %p414 = por %p412, %p413
      %p415 = scmp.ne.s32.totalorder %s404, %s405
      %p416 = scmp.eq.s32.totalorder %s30, 0
      %p417 = por %p415, %p416
      %p418 = scmp.ne.s32.totalorder %s404, %s405
      %p419 = scmp.eq.s32.totalorder %s31, 1
      %p420 = por %p418, %p419
      %p422 = scmp.ne.s32.totalorder %s405, %s421
      %p423 = scmp.eq.s32.totalorder %s31, 0
      %p424 = por %p422, %p423
      %p425 = scmp.le.s32.totalorder 1, %s25
      %p426 = scmp.lt.s32.totalorder %s25, 3
      %p427 = pnand %p425, %p426
      %p428 = pneg %p427
      // Predicated region
      $region9: #{tpu_custom_call.1} parent=5 // pred_check
        _
      $region10: #{tpu_custom_call.1} parent=5 // pred_check_branch
        %430 = sbr.rel (%p427) target = $region12
      $region11: #{tpu_custom_call.1} parent=5 // pred_region
        %s431 = ssub.s32 %s25, 1
        // Predicated region
        $region13: #{tpu_custom_call.1} parent=11 // pred_check
          %p432 = pneg %p202
        $region14: #{tpu_custom_call.1} parent=11 // pred_check_branch
          %434 = sbr.rel (%p432) target = $region16
        $region15: #{tpu_custom_call.1} parent=11 // pred_region
          _
        $region16: #{tpu_custom_call.1} parent=11 // pred_fallthru
          _
        // Predicated region
        $region17: #{tpu_custom_call.1} parent=11 // pred_check
          %p435 = pneg %p223
        $region18: #{tpu_custom_call.1} parent=11 // pred_check_branch
          %437 = sbr.rel (%p435) target = $region20
        $region19: #{tpu_custom_call.1} parent=11 // pred_region
          _
        $region20: #{tpu_custom_call.1} parent=11 // pred_fallthru
          _
        // Predicated region
        $region21: #{tpu_custom_call.1} parent=11 // pred_check
          %p438 = pneg %p244
        $region22: #{tpu_custom_call.1} parent=11 // pred_check_branch
          %440 = sbr.rel (%p438) target = $region24
        $region23: #{tpu_custom_call.1} parent=11 // pred_region
          _
        $region24: #{tpu_custom_call.1} parent=11 // pred_fallthru
          _
        // Predicated region
        $region25: #{tpu_custom_call.1} parent=11 // pred_check
          %p441 = pneg %p265
        $region26: #{tpu_custom_call.1} parent=11 // pred_check_branch
          %443 = sbr.rel (%p441) target = $region28
        $region27: #{tpu_custom_call.1} parent=11 // pred_region
          _
        $region28: #{tpu_custom_call.1} parent=11 // pred_fallthru
          _
        // Predicated region
        $region29: #{tpu_custom_call.1} parent=11 // pred_check
          %p444 = pneg %p286
        $region30: #{tpu_custom_call.1} parent=11 // pred_check_branch
          %446 = sbr.rel (%p444) target = $region32
        $region31: #{tpu_custom_call.1} parent=11 // pred_region
          _
        $region32: #{tpu_custom_call.1} parent=11 // pred_fallthru
          _
        // Predicated region
        $region33: #{tpu_custom_call.1} parent=11 // pred_check
          %p447 = pneg %p307
        $region34: #{tpu_custom_call.1} parent=11 // pred_check_branch
          %449 = sbr.rel (%p447) target = $region36
        $region35: #{tpu_custom_call.1} parent=11 // pred_region
          _
        $region36: #{tpu_custom_call.1} parent=11 // pred_fallthru
          _
        // Predicated region
        $region37: #{tpu_custom_call.1} parent=11 // pred_check
          %p450 = pneg %p328
        $region38: #{tpu_custom_call.1} parent=11 // pred_check_branch
          %452 = sbr.rel (%p450) target = $region40
        $region39: #{tpu_custom_call.1} parent=11 // pred_region
          _
        $region40: #{tpu_custom_call.1} parent=11 // pred_fallthru
          _
        // Predicated region
        $region41: #{tpu_custom_call.1} parent=11 // pred_check
          %p453 = pneg %p349
        $region42: #{tpu_custom_call.1} parent=11 // pred_check_branch
          %455 = sbr.rel (%p453) target = $region44
        $region43: #{tpu_custom_call.1} parent=11 // pred_region
          _
        $region44: #{tpu_custom_call.1} parent=11 // pred_fallthru
          _
        // Predicated region
        $region45: #{tpu_custom_call.1} parent=11 // pred_check
          %p456 = pneg %p370
        $region46: #{tpu_custom_call.1} parent=11 // pred_check_branch
          %458 = sbr.rel (%p456) target = $region48
        $region47: #{tpu_custom_call.1} parent=11 // pred_region
          _
        $region48: #{tpu_custom_call.1} parent=11 // pred_fallthru
          _
        // Predicated region
        $region49: #{tpu_custom_call.1} parent=11 // pred_check
          %p459 = pneg %p391
        $region50: #{tpu_custom_call.1} parent=11 // pred_check_branch
          %461 = sbr.rel (%p459) target = $region52
        $region51: #{tpu_custom_call.1} parent=11 // pred_region
          _
        $region52: #{tpu_custom_call.1} parent=11 // pred_fallthru
          _
      $region12: #{tpu_custom_call.1} parent=5 // pred_fallthru
        _
      %p462 = scmp.lt.s32.totalorder %s25, 2
      // Predicated region
      $region53: #{tpu_custom_call.1} parent=5 // pred_check
        %p463 = pneg %p462
      $region54: #{tpu_custom_call.1} parent=5 // pred_check_branch
        %465 = sbr.rel (%p463) target = $region56
      $region55: #{tpu_custom_call.1} parent=5 // pred_region
        // Predicated region
        $region57: #{tpu_custom_call.1} parent=55 // pred_check
          %p466 = pneg %p45
        $region58: #{tpu_custom_call.1} parent=55 // pred_check_branch
          %468 = sbr.rel (%p466) target = $region60
        $region59: #{tpu_custom_call.1} parent=55 // pred_region
          %p469 = scmp.lt.s32.totalorder %s25, 1
          %s470 = scalar_select %p469, %s25, 1
          %s471 = smul.addr %s470, 4
          %s472 = scalar_lea.vmem %s0, %s471
        $region60: #{tpu_custom_call.1} parent=55 // pred_fallthru
          _
        // Predicated region
        $region61: #{tpu_custom_call.1} parent=55 // pred_check
          %p473 = pneg %p71
        $region62: #{tpu_custom_call.1} parent=55 // pred_check_branch
          %475 = sbr.rel (%p473) target = $region64
        $region63: #{tpu_custom_call.1} parent=55 // pred_region
          %p476 = scmp.lt.s32.totalorder %s25, 1
          %s477 = scalar_select %p476, %s25, 1
          %s478 = scalar_lea.vmem %s1, %s477
        $region64: #{tpu_custom_call.1} parent=55 // pred_fallthru
          _
        // Predicated region
        $region65: #{tpu_custom_call.1} parent=55 // pred_check
          %p479 = pneg %p97
        $region66: #{tpu_custom_call.1} parent=55 // pred_check_branch
          %481 = sbr.rel (%p479) target = $region68
        $region67: #{tpu_custom_call.1} parent=55 // pred_region
          %p482 = scmp.lt.s32.totalorder %s25, 1
          %s483 = scalar_select %p482, %s25, 1
          %s484 = smul.addr %s483, 2
          %s485 = smul.addr %s484, 4
          %s486 = scalar_lea.vmem %s2, %s485
        $region68: #{tpu_custom_call.1} parent=55 // pred_fallthru
          _
        // Predicated region
        $region69: #{tpu_custom_call.1} parent=55 // pred_check
          %p487 = pneg %p123
        $region70: #{tpu_custom_call.1} parent=55 // pred_check_branch
          %489 = sbr.rel (%p487) target = $region72
        $region71: #{tpu_custom_call.1} parent=55 // pred_region
          %p490 = scmp.lt.s32.totalorder %s25, 1
          %s491 = scalar_select %p490, %s25, 1
          %s492 = smul.addr %s491, 4
          %s493 = smul.addr %s492, 4
          %s494 = scalar_lea.vmem %s3, %s493
        $region72: #{tpu_custom_call.1} parent=55 // pred_fallthru
          _
        // Predicated region
        $region73: #{tpu_custom_call.1} parent=55 // pred_check
          %p495 = pneg %p149
        $region74: #{tpu_custom_call.1} parent=55 // pred_check_branch
          %497 = sbr.rel (%p495) target = $region76
        $region75: #{tpu_custom_call.1} parent=55 // pred_region
          %p498 = scmp.lt.s32.totalorder %s25, 1
          %s499 = scalar_select %p498, %s25, 1
          %s500 = smul.addr %s499, 2
          %s501 = scalar_lea.vmem %s4, %s500
        $region76: #{tpu_custom_call.1} parent=55 // pred_fallthru
          _
        // Predicated region
        $region77: #{tpu_custom_call.1} parent=55 // pred_check
          %p502 = pneg %p175
        $region78: #{tpu_custom_call.1} parent=55 // pred_check_branch
          %504 = sbr.rel (%p502) target = $region80
        $region79: #{tpu_custom_call.1} parent=55 // pred_region
          %p505 = scmp.lt.s32.totalorder %s25, 1
          %s506 = scalar_select %p505, %s25, 1
          %s507 = smul.addr %s506, 2
          %s508 = scalar_lea.vmem %s5, %s507
        $region80: #{tpu_custom_call.1} parent=55 // pred_fallthru
          _
      $region56: #{tpu_custom_call.1} parent=5 // pred_fallthru
        _
      %p509 = scmp.le.s32.totalorder 1, %s25
      %p510 = scmp.lt.s32.totalorder %s25, 3
      %p511 = pnand %p509, %p510
      %p512 = pneg %p511
      // Predicated region
      $region81: #{tpu_custom_call.1} parent=5 // pred_check
        _
      $region82: #{tpu_custom_call.1} parent=5 // pred_check_branch
        %514 = sbr.rel (%p511) target = $region84
      $region83: #{tpu_custom_call.1} parent=5 // pred_region
        %s515 = ssub.s32 %s25, 1
        %p516 = scmp.lt.s32.totalorder %s30, 1
        %s517 = scalar_select %p516, %s30, 1
        %s518 = smul.addr %s517, 4
        %s519 = scalar_lea.vmem %s0, %s518
        %p520 = pneg %p51
        %p521 = pneg %p48
        %p522 = scmp.lt.s32.totalorder %s30, 1
        %s523 = scalar_select %p522, %s30, 1
        %s524 = scalar_lea.vmem %s1, %s523
        %p525 = pneg %p77
        %p526 = pneg %p74
        %p527 = scmp.lt.s32.totalorder %s30, 1
        %s528 = scalar_select %p527, %s30, 1
        %s529 = smul.addr %s528, 2
        %s530 = smul.addr %s529, 4
        %s531 = scalar_lea.vmem %s2, %s530
        %p532 = pneg %p103
        %p533 = pneg %p100
        %p534 = scmp.lt.s32.totalorder %s30, 1
        %s535 = scalar_select %p534, %s30, 1
        %s536 = smul.addr %s535, 4
        %s537 = smul.addr %s536, 4
        %s538 = scalar_lea.vmem %s3, %s537
        %p539 = pneg %p129
        %p540 = pneg %p126
        %p541 = scmp.lt.s32.totalorder %s30, 1
        %s542 = scalar_select %p541, %s30, 1
        %s543 = smul.addr %s542, 2
        %s544 = scalar_lea.vmem %s4, %s543
        %p545 = pneg %p155
        %p546 = pneg %p152
        %p547 = scmp.lt.s32.totalorder %s30, 1
        %s548 = scalar_select %p547, %s30, 1
        %s549 = smul.addr %s548, 2
        %s550 = scalar_lea.vmem %s5, %s549
        %p551 = pneg %p181
        %p552 = pneg %p178
        %p553 = pneg %p202
        %p554 = pneg %p199
        %p555 = pneg %p223
        %p556 = pneg %p220
        %p557 = pneg %p244
        %p558 = pneg %p241
        %p559 = pneg %p265
        %p560 = pneg %p262
        %p561 = pneg %p286
        %p562 = pneg %p283
        %p563 = pneg %p307
        %p564 = pneg %p304
        %p565 = pneg %p328
        %p566 = pneg %p325
        %p567 = pneg %p349
        %p568 = pneg %p346
        %p569 = pneg %p370
        %p570 = pneg %p367
        %p571 = pneg %p391
        %p572 = pneg %p388
        %p573 = pneg %p417
        %p574 = pneg %p414
        %s575 = sand.u32 %s404, 1
        %s576 = scalar_lea.sflag [#allocation5], %s575
        %s577 = sand.u32 %s404, 1
        %s578 = smul.addr %s577, 8
        %s579 = scalar_lea.vmem [#allocation4], %s578
        %p580 = scmp.lt.s32.totalorder %s30, 1
        %s581 = scalar_select %p580, %s30, 1
        %s582 = smul.addr %s581, 4
        %s583 = scalar_lea.vmem %s0, %s582
        %p584 = scmp.lt.s32.totalorder %s30, 1
        %s585 = scalar_select %p584, %s30, 1
        %s586 = scalar_lea.vmem %s1, %s585
        %p587 = scmp.lt.s32.totalorder %s30, 1
        %s588 = scalar_select %p587, %s30, 1
        %s589 = smul.addr %s588, 2
        %s590 = smul.addr %s589, 4
        %s591 = scalar_lea.vmem %s2, %s590
        %p592 = scmp.lt.s32.totalorder %s30, 1
        %s593 = scalar_select %p592, %s30, 1
        %s594 = smul.addr %s593, 4
        %s595 = smul.addr %s594, 4
        %s596 = scalar_lea.vmem %s3, %s595
        %p597 = scmp.lt.s32.totalorder %s30, 1
        %s598 = scalar_select %p597, %s30, 1
        %s599 = smul.addr %s598, 2
        %s600 = scalar_lea.vmem %s4, %s599
        %p601 = scmp.lt.s32.totalorder %s30, 1
        %s602 = scalar_select %p601, %s30, 1
        %s603 = smul.addr %s602, 2
        %s604 = scalar_lea.vmem %s5, %s603
        %v606 = vld [vmem:[%s600] sm:$0x3]
        %v607 = vld [vmem:[%s604] sm:$0x3]
        %v608 = vld [vmem:[%s583] sm:$0xf]
        %v609 = vld [vmem:[%s6] sm:$0xf]
        %v610 = vld [vmem:[%s6 + $0x4] sm:$0xf]
        %v611 = vld [vmem:[%s8] sm:$0x1]
        %v613 = vperm.slane %v611, 0
        %v617 = vunpack.c.l.b16 %v609
        %v618 = vunpack.c.l.b16 %v610
        %v619 = vpack.c.b16 %v618, %v617
        %vm621 = vcmask 130048
        %v623 = vsel %vm621, %v608, 0
        %625 = vmatpush.bf16.msra.mxu0 0
        %626 = vmatpush.bf16.msra.mxu0 0
        %627 = vmatpush.bf16.msra.mxu0 0
        %628 = vmatpush.bf16.msra.mxu0 0
        %629 = vmatpush.bf16.msra.mxu0 0
        %630 = vmatpush.bf16.msra.mxu0 0
        %631 = vmatpush.bf16.msra.mxu0 0
        %632 = vmatpush.bf16.msra.mxu0 %v619
        %633 = vmatmul.bf16.gmra.mxu0 %v623
        %v634 = vpop.f32.mrf.mxu0
        %v635 = vadd.f32 %v613, %v634
        %v636 = vpop.f32.mrf.mxu0
        %637 = vdwg.mxu0
        %v638 = vld [vmem:[%s7] sm:$0xf]
        %v639 = vld [vmem:[%s7 + $0x4] sm:$0xf]
        %v640 = vld [vmem:[%s7 + $0x8] sm:$0xf]
        %v641 = vld [vmem:[%s7 + $0xc] sm:$0xf]
        %v642 = vpack.c.bf16 %v606, %v606
        %v647 = vunpack.c.l.b16 %v638
        %v648 = vunpack.c.l.b16 %v639
        %v649 = vunpack.c.l.b16 %v640
        %v650 = vunpack.c.l.b16 %v641
        %v651 = vpack.c.b16 %v648, %v647
        %v652 = vpack.c.b16 %v650, %v649
        %vm655 = vcmask 261120
        %v657 = vsel %vm655, %v642, 0
        %659 = vmatpush.bf16.msra.mxu0 0
        %660 = vmatpush.bf16.msra.mxu0 0
        %661 = vmatpush.bf16.msra.mxu0 0
        %662 = vmatpush.bf16.msra.mxu0 0
        %663 = vmatpush.bf16.msra.mxu0 0
        %664 = vmatpush.bf16.msra.mxu0 0
        %665 = vmatpush.bf16.msra.mxu0 %v652
        %666 = vmatpush.bf16.msra.mxu0 %v651
        %667 = vmatmul.bf16.gmra.mxu0 %v657
        %v668 = vpop.f32.mrf.mxu0
        %v669 = vadd.f32 0.0, %v668
        %v670 = vpop.f32.mrf.mxu0
        %671 = vdwg.mxu0
        %v672 = vadd.f32 %v635, %v669
        %v673 = vxor.u32 %v672, 2147483648
        %v674 = vmul.f32 %v673, 1.442695
        %v675 = vpow.pop %v674
        %v676 = vadd.f32 %v675, 1.0
        %v677 = vrcp.pop %v676
        %v678 = vmul.f32 %v676, %v677
        %v679 = vsub.f32 1.0, %v678
        %v680 = vmul.f32 %v677, %v679
        %v681 = vadd.f32 %v677, %v680
        %vm682 = vweird.f32 %v676
        %vm683 = vweird.f32 %v677
        %vm684 = vmor %vm682, %vm683
        %v685 = vsel %vm684, %v677, %v681
        %v686 = vand.u32 2147483647, %v676
        %vm687 = vcmp.eq.f32.partialorder %v686, 8.507059e+37
        %v688 = vand.u32 %v676, 2147483648
        %v689 = vor.u32 1.1754944e-38, %v688
        %v690 = vsel %vm687, %v689, %v685
        %v691 = vmul.f32 1.0, %v690
        %v692 = vmul.f32 %v691, 2.0
        %v693 = vsub.f32 %v692, 1.0
        %695 = vrot.lane.b32.xlu0 %v607, 32
        %v696 = vpop.permute.xlu0 %695
        %v698 = vmul.f32 %v691, %v696
        %700 = vrot.lane.b32.xlu0 %v693, 32
        %v701 = vpop.permute.xlu0 %700
        %v703 = vmul.f32 %v691, %v701
        %705 = vrot.lane.b32.xlu0 %v703, 32
        %v706 = vpop.permute.xlu0 %705
        %v708 = vadd.f32 %v698, %v706
        %v709 = vtanh.pop %v708
        %711 = vrot.lane.b32.xlu0 %v709, 32
        %v712 = vpop.permute.xlu0 %711
        %v714 = vmul.f32 %v691, %v712
        %v715 = vpack.c.bf16 %v714, %v714
        %717 = vrot.lane.b32.xlu0 %v715, 64
        %v718 = vpop.permute.xlu0 %717
        %vm720 = vcmask 253952
        %vm721 = vsmask.f32 256
        %vm722 = vmand %vm720, %vm721
        %v723 = vld [vmem:[#allocation2] sm:$0x1]
        %v724 = vsel %vm722, %v718, %v723
        %725 = vst [vmem:[#allocation2] sm:$0x1] %v724
        %v726 = vunpack.c.l.b16 %v715
        %v727 = vpack.c.b16 %v726, %v726
        %728 = vrot.lane.b32.xlu0 %v727, 64
        %v729 = vpop.permute.xlu0 %728
        %v731 = vsel %vm655, %v729, 0
        %733 = vmatpush.bf16.msra.mxu0 0
        %734 = vmatpush.bf16.msra.mxu0 0
        %735 = vmatpush.bf16.msra.mxu0 0
        %736 = vmatpush.bf16.msra.mxu0 0
        %737 = vmatpush.bf16.msra.mxu0 0
        %738 = vmatpush.bf16.msra.mxu0 0
        %739 = vmatpush.bf16.msra.mxu0 %v652
        %740 = vmatpush.bf16.msra.mxu0 %v651
        %741 = vmatmul.bf16.gmra.mxu0 %v731
        %v742 = vpop.f32.mrf.mxu0
        %v743 = vadd.f32 0.0, %v742
        %v744 = vpop.f32.mrf.mxu0
        %745 = vdwg.mxu0
        %v747 = vrot.slane %v743, 7
        %v749 = vadd.f32 %v635, %v747
        %v750 = vxor.u32 %v749, 2147483648
        %v751 = vmul.f32 %v750, 1.442695
        %v752 = vpow.pop %v751
        %v753 = vadd.f32 %v752, 1.0
        %v754 = vrcp.pop %v753
        %v755 = vmul.f32 %v753, %v754
        %v756 = vsub.f32 1.0, %v755
        %v757 = vmul.f32 %v754, %v756
        %v758 = vadd.f32 %v754, %v757
        %vm759 = vweird.f32 %v753
        %vm760 = vweird.f32 %v754
        %vm761 = vmor %vm759, %vm760
        %v762 = vsel %vm761, %v754, %v758
        %v763 = vand.u32 2147483647, %v753
        %vm764 = vcmp.eq.f32.partialorder %v763, 8.507059e+37
        %v765 = vand.u32 %v753, 2147483648
        %v766 = vor.u32 1.1754944e-38, %v765
        %v767 = vsel %vm764, %v766, %v762
        %v768 = vmul.f32 1.0, %v767
        %v769 = vmul.f32 %v768, 2.0
        %v770 = vsub.f32 %v769, 1.0
        %v772 = vrot.slane %v708, 7
        %v774 = vmul.f32 %v768, %v772
        %776 = vrot.lane.b32.xlu0 %v770, 32
        %v777 = vpop.permute.xlu0 %776
        %v779 = vmul.f32 %v768, %v777
        %781 = vrot.lane.b32.xlu0 %v779, 32
        %v782 = vpop.permute.xlu0 %781
        %v784 = vadd.f32 %v774, %v782
        %v785 = vtanh.pop %v784
        %787 = vrot.lane.b32.xlu0 %v785, 32
        %v788 = vpop.permute.xlu0 %787
        %v790 = vmul.f32 %v768, %v788
        %v791 = vpack.c.bf16 %v790, %v790
        %793 = vrot.lane.b32.xlu0 %v791, 64
        %v794 = vpop.permute.xlu0 %793
        %vm796 = vsmask.f32 7938
        %vm797 = vmand %vm720, %vm796
        %v798 = vld [vmem:[#allocation2] sm:$0x1]
        %v799 = vsel %vm797, %v794, %v798
        %800 = vst [vmem:[#allocation2] sm:$0x1] %v799
        %v801 = vunpack.c.l.b16 %v791
        %v802 = vpack.c.b16 %v801, %v801
        %v804 = vshrl.u32 %v802, 16
        %806 = vrot.lane.b32.xlu0 %v804, 64
        %v807 = vpop.permute.xlu0 %806
        %v809 = vsel %vm655, %v807, 0
        %811 = vmatpush.bf16.msra.mxu0 0
        %812 = vmatpush.bf16.msra.mxu0 0
        %813 = vmatpush.bf16.msra.mxu0 0
        %814 = vmatpush.bf16.msra.mxu0 0
        %815 = vmatpush.bf16.msra.mxu0 0
        %816 = vmatpush.bf16.msra.mxu0 0
        %817 = vmatpush.bf16.msra.mxu0 %v652
        %818 = vmatpush.bf16.msra.mxu0 %v651
        %819 = vmatmul.bf16.gmra.mxu0 %v809
        %v820 = vpop.f32.mrf.mxu0
        %v821 = vadd.f32 0.0, %v820
        %v822 = vpop.f32.mrf.mxu0
        %823 = vdwg.mxu0
        %v825 = vrot.slane %v821, 6
        %v827 = vadd.f32 %v635, %v825
        %v828 = vxor.u32 %v827, 2147483648
        %v829 = vmul.f32 %v828, 1.442695
        %v830 = vpow.pop %v829
        %v831 = vadd.f32 %v830, 1.0
        %v832 = vrcp.pop %v831
        %v833 = vmul.f32 %v831, %v832
        %v834 = vsub.f32 1.0, %v833
        %v835 = vmul.f32 %v832, %v834
        %v836 = vadd.f32 %v832, %v835
        %vm837 = vweird.f32 %v831
        %vm838 = vweird.f32 %v832
        %vm839 = vmor %vm837, %vm838
        %v840 = vsel %vm839, %v832, %v836
        %v841 = vand.u32 2147483647, %v831
        %vm842 = vcmp.eq.f32.partialorder %v841, 8.507059e+37
        %v843 = vand.u32 %v831, 2147483648
        %v844 = vor.u32 1.1754944e-38, %v843
        %v845 = vsel %vm842, %v844, %v840
        %v846 = vmul.f32 1.0, %v845
        %v847 = vmul.f32 %v846, 2.0
        %v848 = vsub.f32 %v847, 1.0
        %v850 = vrot.slane %v784, 7
        %v852 = vmul.f32 %v846, %v850
        %854 = vrot.lane.b32.xlu0 %v848, 32
        %v855 = vpop.permute.xlu0 %854
        %v857 = vmul.f32 %v846, %v855
        %859 = vrot.lane.b32.xlu0 %v857, 32
        %v860 = vpop.permute.xlu0 %859
        %v862 = vadd.f32 %v852, %v860
        %v863 = vtanh.pop %v862
        %865 = vrot.lane.b32.xlu0 %v863, 32
        %v866 = vpop.permute.xlu0 %865
        %v868 = vmul.f32 %v846, %v866
        %v869 = vpack.c.bf16 %v868, %v868
        %871 = vrot.lane.b32.xlu0 %v869, 64
        %v872 = vpop.permute.xlu0 %871
        %vm874 = vcmask 254977
        %vm875 = vsmask.f32 1280
        %vm876 = vmand %vm874, %vm875
        %v877 = vld [vmem:[#allocation2] sm:$0x2]
        %v878 = vsel %vm876, %v872, %v877
        %879 = vst [vmem:[#allocation2] sm:$0x2] %v878
        %v880 = vunpack.c.l.b16 %v869
        %v881 = vpack.c.b16 %v880, %v880
        %v882 = vrot.slane %v881, 1
        %883 = vrot.lane.b32.xlu0 %v882, 64
        %v884 = vpop.permute.xlu0 %883
        %v886 = vsel %vm655, %v884, 0
        %888 = vmatpush.bf16.msra.mxu0 0
        %889 = vmatpush.bf16.msra.mxu0 0
        %890 = vmatpush.bf16.msra.mxu0 0
        %891 = vmatpush.bf16.msra.mxu0 0
        %892 = vmatpush.bf16.msra.mxu0 0
        %893 = vmatpush.bf16.msra.mxu0 0
        %894 = vmatpush.bf16.msra.mxu0 %v652
        %895 = vmatpush.bf16.msra.mxu0 %v651
        %896 = vmatmul.bf16.gmra.mxu0 %v886
        %v897 = vpop.f32.mrf.mxu0
        %v898 = vadd.f32 0.0, %v897
        %v899 = vpop.f32.mrf.mxu0
        %900 = vdwg.mxu0
        %v902 = vrot.slane %v898, 5
        %v904 = vadd.f32 %v635, %v902
        %v905 = vxor.u32 %v904, 2147483648
        %v906 = vmul.f32 %v905, 1.442695
        %v907 = vpow.pop %v906
        %v908 = vadd.f32 %v907, 1.0
        %v909 = vrcp.pop %v908
        %v910 = vmul.f32 %v908, %v909
        %v911 = vsub.f32 1.0, %v910
        %v912 = vmul.f32 %v909, %v911
        %v913 = vadd.f32 %v909, %v912
        %vm914 = vweird.f32 %v908
        %vm915 = vweird.f32 %v909
        %vm916 = vmor %vm914, %vm915
        %v917 = vsel %vm916, %v909, %v913
        %v918 = vand.u32 2147483647, %v908
        %vm919 = vcmp.eq.f32.partialorder %v918, 8.507059e+37
        %v920 = vand.u32 %v908, 2147483648
        %v921 = vor.u32 1.1754944e-38, %v920
        %v922 = vsel %vm919, %v921, %v917
        %v923 = vmul.f32 1.0, %v922
        %v924 = vmul.f32 %v923, 2.0
        %v925 = vsub.f32 %v924, 1.0
        %v927 = vrot.slane %v862, 7
        %v929 = vmul.f32 %v923, %v927
        %931 = vrot.lane.b32.xlu0 %v925, 32
        %v932 = vpop.permute.xlu0 %931
        %v934 = vmul.f32 %v923, %v932
        %936 = vrot.lane.b32.xlu0 %v934, 32
        %v937 = vpop.permute.xlu0 %936
        %v939 = vadd.f32 %v929, %v937
        %v940 = vtanh.pop %v939
        %942 = vrot.lane.b32.xlu0 %v940, 32
        %v943 = vpop.permute.xlu0 %942
        %v945 = vmul.f32 %v923, %v943
        %v946 = vpack.c.bf16 %v945, %v945
        %948 = vrot.lane.b32.xlu0 %v946, 64
        %v949 = vpop.permute.xlu0 %948
        %vm951 = vsmask.f32 7942
        %vm952 = vmand %vm874, %vm951
        %v953 = vld [vmem:[#allocation2] sm:$0x2]
        %v954 = vsel %vm952, %v949, %v953
        %955 = vst [vmem:[#allocation2] sm:$0x2] %v954
        %v956 = vunpack.c.l.b16 %v946
        %v957 = vpack.c.b16 %v956, %v956
        %v959 = vshrl.u32 %v957, 16
        %v961 = vrot.slane %v959, 1
        %962 = vrot.lane.b32.xlu0 %v961, 64
        %v963 = vpop.permute.xlu0 %962
        %v965 = vsel %vm655, %v963, 0
        %967 = vmatpush.bf16.msra.mxu0 0
        %968 = vmatpush.bf16.msra.mxu0 0
        %969 = vmatpush.bf16.msra.mxu0 0
        %970 = vmatpush.bf16.msra.mxu0 0
        %971 = vmatpush.bf16.msra.mxu0 0
        %972 = vmatpush.bf16.msra.mxu0 0
        %973 = vmatpush.bf16.msra.mxu0 %v652
        %974 = vmatpush.bf16.msra.mxu0 %v651
        %975 = vmatmul.bf16.gmra.mxu0 %v965
        %v976 = vpop.f32.mrf.mxu0
        %v977 = vadd.f32 0.0, %v976
        %v978 = vpop.f32.mrf.mxu0
        %979 = vdwg.mxu0
        %v981 = vrot.slane %v977, 4
        %v983 = vadd.f32 %v635, %v981
        %v984 = vxor.u32 %v983, 2147483648
        %v985 = vmul.f32 %v984, 1.442695
        %v986 = vpow.pop %v985
        %v987 = vadd.f32 %v986, 1.0
        %v988 = vrcp.pop %v987
        %v989 = vmul.f32 %v987, %v988
        %v990 = vsub.f32 1.0, %v989
        %v991 = vmul.f32 %v988, %v990
        %v992 = vadd.f32 %v988, %v991
        %vm993 = vweird.f32 %v987
        %vm994 = vweird.f32 %v988
        %vm995 = vmor %vm993, %vm994
        %v996 = vsel %vm995, %v988, %v992
        %v997 = vand.u32 2147483647, %v987
        %vm998 = vcmp.eq.f32.partialorder %v997, 8.507059e+37
        %v999 = vand.u32 %v987, 2147483648
        %v1000 = vor.u32 1.1754944e-38, %v999
        %v1001 = vsel %vm998, %v1000, %v996
        %v1002 = vmul.f32 1.0, %v1001
        %v1003 = vmul.f32 %v1002, 2.0
        %v1004 = vsub.f32 %v1003, 1.0
        %v1006 = vrot.slane %v939, 7
        %v1008 = vmul.f32 %v1002, %v1006
        %1010 = vrot.lane.b32.xlu0 %v1004, 32
        %v1011 = vpop.permute.xlu0 %1010
        %v1013 = vmul.f32 %v1002, %v1011
        %1015 = vrot.lane.b32.xlu0 %v1013, 32
        %v1016 = vpop.permute.xlu0 %1015
        %v1018 = vadd.f32 %v1008, %v1016
        %v1019 = vtanh.pop %v1018
        %1021 = vrot.lane.b32.xlu0 %v1019, 32
        %v1022 = vpop.permute.xlu0 %1021
        %v1024 = vmul.f32 %v1002, %v1022
        %v1025 = vpack.c.bf16 %v1024, %v1024
        %1027 = vrot.lane.b32.xlu0 %v1025, 64
        %v1028 = vpop.permute.xlu0 %1027
        %vm1030 = vcmask 256002
        %vm1031 = vsmask.f32 2304
        %vm1032 = vmand %vm1030, %vm1031
        %v1033 = vld [vmem:[#allocation2] sm:$0x4]
        %v1034 = vsel %vm1032, %v1028, %v1033
        %1035 = vst [vmem:[#allocation2] sm:$0x4] %v1034
        %v1036 = vunpack.c.l.b16 %v1025
        %v1037 = vpack.c.b16 %v1036, %v1036
        %v1038 = vrot.slane %v1037, 2
        %1039 = vrot.lane.b32.xlu0 %v1038, 64
        %v1040 = vpop.permute.xlu0 %1039
        %v1042 = vsel %vm655, %v1040, 0
        %1044 = vmatpush.bf16.msra.mxu0 0
        %1045 = vmatpush.bf16.msra.mxu0 0
        %1046 = vmatpush.bf16.msra.mxu0 0
        %1047 = vmatpush.bf16.msra.mxu0 0
        %1048 = vmatpush.bf16.msra.mxu0 0
        %1049 = vmatpush.bf16.msra.mxu0 0
        %1050 = vmatpush.bf16.msra.mxu0 %v652
        %1051 = vmatpush.bf16.msra.mxu0 %v651
        %1052 = vmatmul.bf16.gmra.mxu0 %v1042
        %v1053 = vpop.f32.mrf.mxu0
        %v1054 = vadd.f32 0.0, %v1053
        %v1055 = vpop.f32.mrf.mxu0
        %1056 = vdwg.mxu0
        %v1058 = vrot.slane %v1054, 3
        %v1060 = vadd.f32 %v635, %v1058
        %v1061 = vxor.u32 %v1060, 2147483648
        %v1062 = vmul.f32 %v1061, 1.442695
        %v1063 = vpow.pop %v1062
        %v1064 = vadd.f32 %v1063, 1.0
        %v1065 = vrcp.pop %v1064
        %v1066 = vmul.f32 %v1064, %v1065
        %v1067 = vsub.f32 1.0, %v1066
        %v1068 = vmul.f32 %v1065, %v1067
        %v1069 = vadd.f32 %v1065, %v1068
        %vm1070 = vweird.f32 %v1064
        %vm1071 = vweird.f32 %v1065
        %vm1072 = vmor %vm1070, %vm1071
        %v1073 = vsel %vm1072, %v1065, %v1069
        %v1074 = vand.u32 2147483647, %v1064
        %vm1075 = vcmp.eq.f32.partialorder %v1074, 8.507059e+37
        %v1076 = vand.u32 %v1064, 2147483648
        %v1077 = vor.u32 1.1754944e-38, %v1076
        %v1078 = vsel %vm1075, %v1077, %v1073
        %v1079 = vmul.f32 1.0, %v1078
        %v1080 = vmul.f32 %v1079, 2.0
        %v1081 = vsub.f32 %v1080, 1.0
        %v1083 = vrot.slane %v1018, 7
        %v1085 = vmul.f32 %v1079, %v1083
        %1087 = vrot.lane.b32.xlu0 %v1081, 32
        %v1088 = vpop.permute.xlu0 %1087
        %v1090 = vmul.f32 %v1079, %v1088
        %1092 = vrot.lane.b32.xlu0 %v1090, 32
        %v1093 = vpop.permute.xlu0 %1092
        %v1095 = vadd.f32 %v1085, %v1093
        %v1096 = vtanh.pop %v1095
        %1098 = vrot.lane.b32.xlu0 %v1096, 32
        %v1099 = vpop.permute.xlu0 %1098
        %v1101 = vmul.f32 %v1079, %v1099
        %v1102 = vpack.c.bf16 %v1101, %v1101
        %1104 = vrot.lane.b32.xlu0 %v1102, 64
        %v1105 = vpop.permute.xlu0 %1104
        %vm1107 = vsmask.f32 7946
        %vm1108 = vmand %vm1030, %vm1107
        %v1109 = vld [vmem:[#allocation2] sm:$0x4]
        %v1110 = vsel %vm1108, %v1105, %v1109
        %1111 = vst [vmem:[#allocation2] sm:$0x4] %v1110
        %v1112 = vunpack.c.l.b16 %v1102
        %v1113 = vpack.c.b16 %v1112, %v1112
        %v1115 = vshrl.u32 %v1113, 16
        %v1117 = vrot.slane %v1115, 2
        %1118 = vrot.lane.b32.xlu0 %v1117, 64
        %v1119 = vpop.permute.xlu0 %1118
        %v1121 = vsel %vm655, %v1119, 0
        %1123 = vmatpush.bf16.msra.mxu0 0
        %1124 = vmatpush.bf16.msra.mxu0 0
        %1125 = vmatpush.bf16.msra.mxu0 0
        %1126 = vmatpush.bf16.msra.mxu0 0
        %1127 = vmatpush.bf16.msra.mxu0 0
        %1128 = vmatpush.bf16.msra.mxu0 0
        %1129 = vmatpush.bf16.msra.mxu0 %v652
        %1130 = vmatpush.bf16.msra.mxu0 %v651
        %1131 = vmatmul.bf16.gmra.mxu0 %v1121
        %v1132 = vpop.f32.mrf.mxu0
        %v1133 = vadd.f32 0.0, %v1132
        %v1134 = vpop.f32.mrf.mxu0
        %1135 = vdwg.mxu0
        %v1137 = vrot.slane %v1133, 2
        %v1139 = vadd.f32 %v635, %v1137
        %v1140 = vxor.u32 %v1139, 2147483648
        %v1141 = vmul.f32 %v1140, 1.442695
        %v1142 = vpow.pop %v1141
        %v1143 = vadd.f32 %v1142, 1.0
        %v1144 = vrcp.pop %v1143
        %v1145 = vmul.f32 %v1143, %v1144
        %v1146 = vsub.f32 1.0, %v1145
        %v1147 = vmul.f32 %v1144, %v1146
        %v1148 = vadd.f32 %v1144, %v1147
        %vm1149 = vweird.f32 %v1143
        %vm1150 = vweird.f32 %v1144
        %vm1151 = vmor %vm1149, %vm1150
        %v1152 = vsel %vm1151, %v1144, %v1148
        %v1153 = vand.u32 2147483647, %v1143
        %vm1154 = vcmp.eq.f32.partialorder %v1153, 8.507059e+37
        %v1155 = vand.u32 %v1143, 2147483648
        %v1156 = vor.u32 1.1754944e-38, %v1155
        %v1157 = vsel %vm1154, %v1156, %v1152
        %v1158 = vmul.f32 1.0, %v1157
        %v1159 = vmul.f32 %v1158, 2.0
        %v1160 = vsub.f32 %v1159, 1.0
        %v1162 = vrot.slane %v1095, 7
        %v1164 = vmul.f32 %v1158, %v1162
        %1166 = vrot.lane.b32.xlu0 %v1160, 32
        %v1167 = vpop.permute.xlu0 %1166
        %v1169 = vmul.f32 %v1158, %v1167
        %1171 = vrot.lane.b32.xlu0 %v1169, 32
        %v1172 = vpop.permute.xlu0 %1171
        %v1174 = vadd.f32 %v1164, %v1172
        %v1175 = vtanh.pop %v1174
        %1177 = vrot.lane.b32.xlu0 %v1175, 32
        %v1178 = vpop.permute.xlu0 %1177
        %v1180 = vmul.f32 %v1158, %v1178
        %v1181 = vpack.c.bf16 %v1180, %v1180
        %1183 = vrot.lane.b32.xlu0 %v1181, 64
        %v1184 = vpop.permute.xlu0 %1183
        %vm1186 = vcmask 257027
        %vm1187 = vsmask.f32 3328
        %vm1188 = vmand %vm1186, %vm1187
        %v1189 = vld [vmem:[#allocation2] sm:$0x8]
        %v1190 = vsel %vm1188, %v1184, %v1189
        %1191 = vst [vmem:[#allocation2] sm:$0x8] %v1190
        %v1192 = vunpack.c.l.b16 %v1181
        %v1193 = vpack.c.b16 %v1192, %v1192
        %v1194 = vrot.slane %v1193, 3
        %1195 = vrot.lane.b32.xlu0 %v1194, 64
        %v1196 = vpop.permute.xlu0 %1195
        %v1198 = vsel %vm655, %v1196, 0
        %1200 = vmatpush.bf16.msra.mxu0 0
        %1201 = vmatpush.bf16.msra.mxu0 0
        %1202 = vmatpush.bf16.msra.mxu0 0
        %1203 = vmatpush.bf16.msra.mxu0 0
        %1204 = vmatpush.bf16.msra.mxu0 0
        %1205 = vmatpush.bf16.msra.mxu0 0
        %1206 = vmatpush.bf16.msra.mxu0 %v652
        %1207 = vmatpush.bf16.msra.mxu0 %v651
        %1208 = vmatmul.bf16.gmra.mxu0 %v1198
        %v1209 = vpop.f32.mrf.mxu0
        %v1210 = vadd.f32 0.0, %v1209
        %v1211 = vpop.f32.mrf.mxu0
        %1212 = vdwg.mxu0
        %v1214 = vrot.slane %v1210, 1
        %v1216 = vadd.f32 %v635, %v1214
        %v1217 = vxor.u32 %v1216, 2147483648
        %v1218 = vmul.f32 %v1217, 1.442695
        %v1219 = vpow.pop %v1218
        %v1220 = vadd.f32 %v1219, 1.0
        %v1221 = vrcp.pop %v1220
        %v1222 = vmul.f32 %v1220, %v1221
        %v1223 = vsub.f32 1.0, %v1222
        %v1224 = vmul.f32 %v1221, %v1223
        %v1225 = vadd.f32 %v1221, %v1224
        %vm1226 = vweird.f32 %v1220
        %vm1227 = vweird.f32 %v1221
        %vm1228 = vmor %vm1226, %vm1227
        %v1229 = vsel %vm1228, %v1221, %v1225
        %v1230 = vand.u32 2147483647, %v1220
        %vm1231 = vcmp.eq.f32.partialorder %v1230, 8.507059e+37
        %v1232 = vand.u32 %v1220, 2147483648
        %v1233 = vor.u32 1.1754944e-38, %v1232
        %v1234 = vsel %vm1231, %v1233, %v1229
        %v1235 = vmul.f32 1.0, %v1234
        %v1236 = vmul.f32 %v1235, 2.0
        %v1237 = vsub.f32 %v1236, 1.0
        %v1239 = vrot.slane %v1174, 7
        %v1241 = vmul.f32 %v1235, %v1239
        %1243 = vrot.lane.b32.xlu0 %v1237, 32
        %v1244 = vpop.permute.xlu0 %1243
        %v1246 = vmul.f32 %v1235, %v1244
        %1248 = vrot.lane.b32.xlu0 %v1246, 32
        %v1249 = vpop.permute.xlu0 %1248
        %v1251 = vadd.f32 %v1241, %v1249
        %v1252 = vtanh.pop %v1251
        %1254 = vrot.lane.b32.xlu0 %v1252, 32
        %v1255 = vpop.permute.xlu0 %1254
        %v1257 = vmul.f32 %v1235, %v1255
        %v1258 = vpack.c.bf16 %v1257, %v1257
        %1260 = vrot.lane.b32.xlu0 %v1258, 64
        %v1261 = vpop.permute.xlu0 %1260
        %vm1263 = vsmask.f32 7950
        %vm1264 = vmand %vm1186, %vm1263
        %v1265 = vld [vmem:[#allocation2] sm:$0x8]
        %v1266 = vsel %vm1264, %v1261, %v1265
        %1267 = vst [vmem:[#allocation2] sm:$0x8] %v1266
        %v1268 = vld [vmem:[#allocation2] sm:$0xf]
        %v1269 = vld [vmem:[%s9] sm:$0xf]
        %v1270 = vld [vmem:[%s9 + $0x4] sm:$0xf]
        %v1271 = vld [vmem:[%s9 + $0x8] sm:$0xf]
        %v1272 = vld [vmem:[%s9 + $0xc] sm:$0xf]
        %v1273 = vld [vmem:[%s11] sm:$0x1]
        %v1275 = vperm.slane %v1273, 0
        %v1281 = vunpack.c.l.b16 %v1269
        %v1282 = vunpack.c.l.b16 %v1270
        %v1283 = vunpack.c.l.b16 %v1271
        %v1284 = vunpack.c.l.b16 %v1272
        %v1285 = vpack.c.b16 %v1282, %v1281
        %v1286 = vpack.c.b16 %v1284, %v1283
        %v1290 = vsel %vm655, %v1268, 0
        %1292 = vmatpush.bf16.msra.mxu0 0
        %1293 = vmatpush.bf16.msra.mxu0 0
        %1294 = vmatpush.bf16.msra.mxu0 0
        %1295 = vmatpush.bf16.msra.mxu0 0
        %1296 = vmatpush.bf16.msra.mxu0 0
        %1297 = vmatpush.bf16.msra.mxu0 0
        %1298 = vmatpush.bf16.msra.mxu0 %v1286
        %1299 = vmatpush.bf16.msra.mxu0 %v1285
        %1300 = vmatmul.bf16.gmra.mxu0 %v1290
        %v1301 = vpop.f32.mrf.mxu0
        %v1302 = vadd.f32 %v1275, %v1301
        %v1303 = vpop.f32.mrf.mxu0
        %1304 = vdwg.mxu0
        %v1305 = vld [vmem:[%s10] sm:$0xf]
        %v1306 = vld [vmem:[%s10 + $0x4] sm:$0xf]
        %v1307 = vld [vmem:[%s10 + $0x8] sm:$0xf]
        %v1308 = vld [vmem:[%s10 + $0xc] sm:$0xf]
        %v1309 = vshrl.u32 %v642, 16
        %v1315 = vunpack.c.l.b16 %v1305
        %v1316 = vunpack.c.l.b16 %v1306
        %v1317 = vunpack.c.l.b16 %v1307
        %v1318 = vunpack.c.l.b16 %v1308
        %v1319 = vpack.c.b16 %v1316, %v1315
        %v1320 = vpack.c.b16 %v1318, %v1317
        %v1324 = vsel %vm655, %v1309, 0
        %1326 = vmatpush.bf16.msra.mxu0 0
        %1327 = vmatpush.bf16.msra.mxu0 0
        %1328 = vmatpush.bf16.msra.mxu0 0
        %1329 = vmatpush.bf16.msra.mxu0 0
        %1330 = vmatpush.bf16.msra.mxu0 0
        %1331 = vmatpush.bf16.msra.mxu0 0
        %1332 = vmatpush.bf16.msra.mxu0 %v1320
        %1333 = vmatpush.bf16.msra.mxu0 %v1319
        %1334 = vmatmul.bf16.gmra.mxu0 %v1324
        %v1335 = vpop.f32.mrf.mxu0
        %v1336 = vadd.f32 0.0, %v1335
        %v1337 = vpop.f32.mrf.mxu0
        %1338 = vdwg.mxu0
        %v1339 = vadd.f32 %v1302, %v1336
        %v1340 = vxor.u32 %v1339, 2147483648
        %v1341 = vmul.f32 %v1340, 1.442695
        %v1342 = vpow.pop %v1341
        %v1343 = vadd.f32 %v1342, 1.0
        %v1344 = vrcp.pop %v1343
        %v1345 = vmul.f32 %v1343, %v1344
        %v1346 = vsub.f32 1.0, %v1345
        %v1347 = vmul.f32 %v1344, %v1346
        %v1348 = vadd.f32 %v1344, %v1347
        %vm1349 = vweird.f32 %v1343
        %vm1350 = vweird.f32 %v1344
        %vm1351 = vmor %vm1349, %vm1350
        %v1352 = vsel %vm1351, %v1344, %v1348
        %v1353 = vand.u32 2147483647, %v1343
        %vm1354 = vcmp.eq.f32.partialorder %v1353, 8.507059e+37
        %v1355 = vand.u32 %v1343, 2147483648
        %v1356 = vor.u32 1.1754944e-38, %v1355
        %v1357 = vsel %vm1354, %v1356, %v1352
        %v1358 = vmul.f32 1.0, %v1357
        %v1359 = vmul.f32 %v1358, 2.0
        %v1360 = vsub.f32 %v1359, 1.0
        %v1361 = vrot.slane %v607, 1
        %1362 = vrot.lane.b32.xlu0 %v1361, 32
        %v1363 = vpop.permute.xlu0 %1362
        %v1365 = vmul.f32 %v1358, %v1363
        %1367 = vrot.lane.b32.xlu0 %v1360, 32
        %v1368 = vpop.permute.xlu0 %1367
        %v1370 = vmul.f32 %v1358, %v1368
        %1372 = vrot.lane.b32.xlu0 %v1370, 32
        %v1373 = vpop.permute.xlu0 %1372
        %v1375 = vadd.f32 %v1365, %v1373
        %v1376 = vtanh.pop %v1375
        %1378 = vrot.lane.b32.xlu0 %v1376, 32
        %v1379 = vpop.permute.xlu0 %1378
        %v1381 = vmul.f32 %v1358, %v1379
        %v1382 = vpack.c.bf16 %v1381, %v1381
        %1384 = vrot.lane.b32.xlu0 %v1382, 64
        %v1385 = vpop.permute.xlu0 %1384
        %v1387 = vld [vmem:[#allocation3] sm:$0x1]
        %v1388 = vsel %vm722, %v1385, %v1387
        %1389 = vst [vmem:[#allocation3] sm:$0x1] %v1388
        %v1390 = vunpack.c.l.b16 %v1382
        %v1391 = vpack.c.b16 %v1390, %v1390
        %1392 = vrot.lane.b32.xlu0 %v1391, 64
        %v1393 = vpop.permute.xlu0 %1392
        %v1395 = vsel %vm655, %v1393, 0
        %1397 = vmatpush.bf16.msra.mxu0 0
        %1398 = vmatpush.bf16.msra.mxu0 0
        %1399 = vmatpush.bf16.msra.mxu0 0
        %1400 = vmatpush.bf16.msra.mxu0 0
        %1401 = vmatpush.bf16.msra.mxu0 0
        %1402 = vmatpush.bf16.msra.mxu0 0
        %1403 = vmatpush.bf16.msra.mxu0 %v1320
        %1404 = vmatpush.bf16.msra.mxu0 %v1319
        %1405 = vmatmul.bf16.gmra.mxu0 %v1395
        %v1406 = vpop.f32.mrf.mxu0
        %v1407 = vadd.f32 0.0, %v1406
        %v1408 = vpop.f32.mrf.mxu0
        %1409 = vdwg.mxu0
        %v1411 = vrot.slane %v1407, 7
        %v1413 = vadd.f32 %v1302, %v1411
        %v1414 = vxor.u32 %v1413, 2147483648
        %v1415 = vmul.f32 %v1414, 1.442695
        %v1416 = vpow.pop %v1415
        %v1417 = vadd.f32 %v1416, 1.0
        %v1418 = vrcp.pop %v1417
        %v1419 = vmul.f32 %v1417, %v1418
        %v1420 = vsub.f32 1.0, %v1419
        %v1421 = vmul.f32 %v1418, %v1420
        %v1422 = vadd.f32 %v1418, %v1421
        %vm1423 = vweird.f32 %v1417
        %vm1424 = vweird.f32 %v1418
        %vm1425 = vmor %vm1423, %vm1424
        %v1426 = vsel %vm1425, %v1418, %v1422
        %v1427 = vand.u32 2147483647, %v1417
        %vm1428 = vcmp.eq.f32.partialorder %v1427, 8.507059e+37
        %v1429 = vand.u32 %v1417, 2147483648
        %v1430 = vor.u32 1.1754944e-38, %v1429
        %v1431 = vsel %vm1428, %v1430, %v1426
        %v1432 = vmul.f32 1.0, %v1431
        %v1433 = vmul.f32 %v1432, 2.0
        %v1434 = vsub.f32 %v1433, 1.0
        %v1436 = vrot.slane %v1375, 7
        %v1438 = vmul.f32 %v1432, %v1436
        %1440 = vrot.lane.b32.xlu0 %v1434, 32
        %v1441 = vpop.permute.xlu0 %1440
        %v1443 = vmul.f32 %v1432, %v1441
        %1445 = vrot.lane.b32.xlu0 %v1443, 32
        %v1446 = vpop.permute.xlu0 %1445
        %v1448 = vadd.f32 %v1438, %v1446
        %v1449 = vtanh.pop %v1448
        %1451 = vrot.lane.b32.xlu0 %v1449, 32
        %v1452 = vpop.permute.xlu0 %1451
        %v1454 = vmul.f32 %v1432, %v1452
        %v1455 = vpack.c.bf16 %v1454, %v1454
        %1457 = vrot.lane.b32.xlu0 %v1455, 64
        %v1458 = vpop.permute.xlu0 %1457
        %v1460 = vld [vmem:[#allocation3] sm:$0x1]
        %v1461 = vsel %vm797, %v1458, %v1460
        %1462 = vst [vmem:[#allocation3] sm:$0x1] %v1461
        %v1463 = vunpack.c.l.b16 %v1455
        %v1464 = vpack.c.b16 %v1463, %v1463
        %v1466 = vshrl.u32 %v1464, 16
        %1468 = vrot.lane.b32.xlu0 %v1466, 64
        %v1469 = vpop.permute.xlu0 %1468
        %v1471 = vsel %vm655, %v1469, 0
        %1473 = vmatpush.bf16.msra.mxu0 0
        %1474 = vmatpush.bf16.msra.mxu0 0
        %1475 = vmatpush.bf16.msra.mxu0 0
        %1476 = vmatpush.bf16.msra.mxu0 0
        %1477 = vmatpush.bf16.msra.mxu0 0
        %1478 = vmatpush.bf16.msra.mxu0 0
        %1479 = vmatpush.bf16.msra.mxu0 %v1320
        %1480 = vmatpush.bf16.msra.mxu0 %v1319
        %1481 = vmatmul.bf16.gmra.mxu0 %v1471
        %v1482 = vpop.f32.mrf.mxu0
        %v1483 = vadd.f32 0.0, %v1482
        %v1484 = vpop.f32.mrf.mxu0
        %1485 = vdwg.mxu0
        %v1487 = vrot.slane %v1483, 6
        %v1489 = vadd.f32 %v1302, %v1487
        %v1490 = vxor.u32 %v1489, 2147483648
        %v1491 = vmul.f32 %v1490, 1.442695
        %v1492 = vpow.pop %v1491
        %v1493 = vadd.f32 %v1492, 1.0
        %v1494 = vrcp.pop %v1493
        %v1495 = vmul.f32 %v1493, %v1494
        %v1496 = vsub.f32 1.0, %v1495
        %v1497 = vmul.f32 %v1494, %v1496
        %v1498 = vadd.f32 %v1494, %v1497
        %vm1499 = vweird.f32 %v1493
        %vm1500 = vweird.f32 %v1494
        %vm1501 = vmor %vm1499, %vm1500
        %v1502 = vsel %vm1501, %v1494, %v1498
        %v1503 = vand.u32 2147483647, %v1493
        %vm1504 = vcmp.eq.f32.partialorder %v1503, 8.507059e+37
        %v1505 = vand.u32 %v1493, 2147483648
        %v1506 = vor.u32 1.1754944e-38, %v1505
        %v1507 = vsel %vm1504, %v1506, %v1502
        %v1508 = vmul.f32 1.0, %v1507
        %v1509 = vmul.f32 %v1508, 2.0
        %v1510 = vsub.f32 %v1509, 1.0
        %v1512 = vrot.slane %v1448, 7
        %v1514 = vmul.f32 %v1508, %v1512
        %1516 = vrot.lane.b32.xlu0 %v1510, 32
        %v1517 = vpop.permute.xlu0 %1516
        %v1519 = vmul.f32 %v1508, %v1517
        %1521 = vrot.lane.b32.xlu0 %v1519, 32
        %v1522 = vpop.permute.xlu0 %1521
        %v1524 = vadd.f32 %v1514, %v1522
        %v1525 = vtanh.pop %v1524
        %1527 = vrot.lane.b32.xlu0 %v1525, 32
        %v1528 = vpop.permute.xlu0 %1527
        %v1530 = vmul.f32 %v1508, %v1528
        %v1531 = vpack.c.bf16 %v1530, %v1530
        %1533 = vrot.lane.b32.xlu0 %v1531, 64
        %v1534 = vpop.permute.xlu0 %1533
        %v1536 = vld [vmem:[#allocation3] sm:$0x2]
        %v1537 = vsel %vm876, %v1534, %v1536
        %1538 = vst [vmem:[#allocation3] sm:$0x2] %v1537
        %v1539 = vunpack.c.l.b16 %v1531
        %v1540 = vpack.c.b16 %v1539, %v1539
        %v1541 = vrot.slane %v1540, 1
        %1542 = vrot.lane.b32.xlu0 %v1541, 64
        %v1543 = vpop.permute.xlu0 %1542
        %v1545 = vsel %vm655, %v1543, 0
        %1547 = vmatpush.bf16.msra.mxu0 0
        %1548 = vmatpush.bf16.msra.mxu0 0
        %1549 = vmatpush.bf16.msra.mxu0 0
        %1550 = vmatpush.bf16.msra.mxu0 0
        %1551 = vmatpush.bf16.msra.mxu0 0
        %1552 = vmatpush.bf16.msra.mxu0 0
        %1553 = vmatpush.bf16.msra.mxu0 %v1320
        %1554 = vmatpush.bf16.msra.mxu0 %v1319
        %1555 = vmatmul.bf16.gmra.mxu0 %v1545
        %v1556 = vpop.f32.mrf.mxu0
        %v1557 = vadd.f32 0.0, %v1556
        %v1558 = vpop.f32.mrf.mxu0
        %1559 = vdwg.mxu0
        %v1561 = vrot.slane %v1557, 5
        %v1563 = vadd.f32 %v1302, %v1561
        %v1564 = vxor.u32 %v1563, 2147483648
        %v1565 = vmul.f32 %v1564, 1.442695
        %v1566 = vpow.pop %v1565
        %v1567 = vadd.f32 %v1566, 1.0
        %v1568 = vrcp.pop %v1567
        %v1569 = vmul.f32 %v1567, %v1568
        %v1570 = vsub.f32 1.0, %v1569
        %v1571 = vmul.f32 %v1568, %v1570
        %v1572 = vadd.f32 %v1568, %v1571
        %vm1573 = vweird.f32 %v1567
        %vm1574 = vweird.f32 %v1568
        %vm1575 = vmor %vm1573, %vm1574
        %v1576 = vsel %vm1575, %v1568, %v1572
        %v1577 = vand.u32 2147483647, %v1567
        %vm1578 = vcmp.eq.f32.partialorder %v1577, 8.507059e+37
        %v1579 = vand.u32 %v1567, 2147483648
        %v1580 = vor.u32 1.1754944e-38, %v1579
        %v1581 = vsel %vm1578, %v1580, %v1576
        %v1582 = vmul.f32 1.0, %v1581
        %v1583 = vmul.f32 %v1582, 2.0
        %v1584 = vsub.f32 %v1583, 1.0
        %v1586 = vrot.slane %v1524, 7
        %v1588 = vmul.f32 %v1582, %v1586
        %1590 = vrot.lane.b32.xlu0 %v1584, 32
        %v1591 = vpop.permute.xlu0 %1590
        %v1593 = vmul.f32 %v1582, %v1591
        %1595 = vrot.lane.b32.xlu0 %v1593, 32
        %v1596 = vpop.permute.xlu0 %1595
        %v1598 = vadd.f32 %v1588, %v1596
        %v1599 = vtanh.pop %v1598
        %1601 = vrot.lane.b32.xlu0 %v1599, 32
        %v1602 = vpop.permute.xlu0 %1601
        %v1604 = vmul.f32 %v1582, %v1602
        %v1605 = vpack.c.bf16 %v1604, %v1604
        %1607 = vrot.lane.b32.xlu0 %v1605, 64
        %v1608 = vpop.permute.xlu0 %1607
        %v1610 = vld [vmem:[#allocation3] sm:$0x2]
        %v1611 = vsel %vm952, %v1608, %v1610
        %1612 = vst [vmem:[#allocation3] sm:$0x2] %v1611
        %v1613 = vunpack.c.l.b16 %v1605
        %v1614 = vpack.c.b16 %v1613, %v1613
        %v1616 = vshrl.u32 %v1614, 16
        %v1618 = vrot.slane %v1616, 1
        %1619 = vrot.lane.b32.xlu0 %v1618, 64
        %v1620 = vpop.permute.xlu0 %1619
        %v1622 = vsel %vm655, %v1620, 0
        %1624 = vmatpush.bf16.msra.mxu0 0
        %1625 = vmatpush.bf16.msra.mxu0 0
        %1626 = vmatpush.bf16.msra.mxu0 0
        %1627 = vmatpush.bf16.msra.mxu0 0
        %1628 = vmatpush.bf16.msra.mxu0 0
        %1629 = vmatpush.bf16.msra.mxu0 0
        %1630 = vmatpush.bf16.msra.mxu0 %v1320
        %1631 = vmatpush.bf16.msra.mxu0 %v1319
        %1632 = vmatmul.bf16.gmra.mxu0 %v1622
        %v1633 = vpop.f32.mrf.mxu0
        %v1634 = vadd.f32 0.0, %v1633
        %v1635 = vpop.f32.mrf.mxu0
        %1636 = vdwg.mxu0
        %v1638 = vrot.slane %v1634, 4
        %v1640 = vadd.f32 %v1302, %v1638
        %v1641 = vxor.u32 %v1640, 2147483648
        %v1642 = vmul.f32 %v1641, 1.442695
        %v1643 = vpow.pop %v1642
        %v1644 = vadd.f32 %v1643, 1.0
        %v1645 = vrcp.pop %v1644
        %v1646 = vmul.f32 %v1644, %v1645
        %v1647 = vsub.f32 1.0, %v1646
        %v1648 = vmul.f32 %v1645, %v1647
        %v1649 = vadd.f32 %v1645, %v1648
        %vm1650 = vweird.f32 %v1644
        %vm1651 = vweird.f32 %v1645
        %vm1652 = vmor %vm1650, %vm1651
        %v1653 = vsel %vm1652, %v1645, %v1649
        %v1654 = vand.u32 2147483647, %v1644
        %vm1655 = vcmp.eq.f32.partialorder %v1654, 8.507059e+37
        %v1656 = vand.u32 %v1644, 2147483648
        %v1657 = vor.u32 1.1754944e-38, %v1656
        %v1658 = vsel %vm1655, %v1657, %v1653
        %v1659 = vmul.f32 1.0, %v1658
        %v1660 = vmul.f32 %v1659, 2.0
        %v1661 = vsub.f32 %v1660, 1.0
        %v1663 = vrot.slane %v1598, 7
        %v1665 = vmul.f32 %v1659, %v1663
        %1667 = vrot.lane.b32.xlu0 %v1661, 32
        %v1668 = vpop.permute.xlu0 %1667
        %v1670 = vmul.f32 %v1659, %v1668
        %1672 = vrot.lane.b32.xlu0 %v1670, 32
        %v1673 = vpop.permute.xlu0 %1672
        %v1675 = vadd.f32 %v1665, %v1673
        %v1676 = vtanh.pop %v1675
        %1678 = vrot.lane.b32.xlu0 %v1676, 32
        %v1679 = vpop.permute.xlu0 %1678
        %v1681 = vmul.f32 %v1659, %v1679
        %v1682 = vpack.c.bf16 %v1681, %v1681
        %1684 = vrot.lane.b32.xlu0 %v1682, 64
        %v1685 = vpop.permute.xlu0 %1684
        %v1687 = vld [vmem:[#allocation3] sm:$0x4]
        %v1688 = vsel %vm1032, %v1685, %v1687
        %1689 = vst [vmem:[#allocation3] sm:$0x4] %v1688
        %v1690 = vunpack.c.l.b16 %v1682
        %v1691 = vpack.c.b16 %v1690, %v1690
        %v1692 = vrot.slane %v1691, 2
        %1693 = vrot.lane.b32.xlu0 %v1692, 64
        %v1694 = vpop.permute.xlu0 %1693
        %v1696 = vsel %vm655, %v1694, 0
        %1698 = vmatpush.bf16.msra.mxu0 0
        %1699 = vmatpush.bf16.msra.mxu0 0
        %1700 = vmatpush.bf16.msra.mxu0 0
        %1701 = vmatpush.bf16.msra.mxu0 0
        %1702 = vmatpush.bf16.msra.mxu0 0
        %1703 = vmatpush.bf16.msra.mxu0 0
        %1704 = vmatpush.bf16.msra.mxu0 %v1320
        %1705 = vmatpush.bf16.msra.mxu0 %v1319
        %1706 = vmatmul.bf16.gmra.mxu0 %v1696
        %v1707 = vpop.f32.mrf.mxu0
        %v1708 = vadd.f32 0.0, %v1707
        %v1709 = vpop.f32.mrf.mxu0
        %1710 = vdwg.mxu0
        %v1712 = vrot.slane %v1708, 3
        %v1714 = vadd.f32 %v1302, %v1712
        %v1715 = vxor.u32 %v1714, 2147483648
        %v1716 = vmul.f32 %v1715, 1.442695
        %v1717 = vpow.pop %v1716
        %v1718 = vadd.f32 %v1717, 1.0
        %v1719 = vrcp.pop %v1718
        %v1720 = vmul.f32 %v1718, %v1719
        %v1721 = vsub.f32 1.0, %v1720
        %v1722 = vmul.f32 %v1719, %v1721
        %v1723 = vadd.f32 %v1719, %v1722
        %vm1724 = vweird.f32 %v1718
        %vm1725 = vweird.f32 %v1719
        %vm1726 = vmor %vm1724, %vm1725
        %v1727 = vsel %vm1726, %v1719, %v1723
        %v1728 = vand.u32 2147483647, %v1718
        %vm1729 = vcmp.eq.f32.partialorder %v1728, 8.507059e+37
        %v1730 = vand.u32 %v1718, 2147483648
        %v1731 = vor.u32 1.1754944e-38, %v1730
        %v1732 = vsel %vm1729, %v1731, %v1727
        %v1733 = vmul.f32 1.0, %v1732
        %v1734 = vmul.f32 %v1733, 2.0
        %v1735 = vsub.f32 %v1734, 1.0
        %v1737 = vrot.slane %v1675, 7
        %v1739 = vmul.f32 %v1733, %v1737
        %1741 = vrot.lane.b32.xlu0 %v1735, 32
        %v1742 = vpop.permute.xlu0 %1741
        %v1744 = vmul.f32 %v1733, %v1742
        %1746 = vrot.lane.b32.xlu0 %v1744, 32
        %v1747 = vpop.permute.xlu0 %1746
        %v1749 = vadd.f32 %v1739, %v1747
        %v1750 = vtanh.pop %v1749
        %1752 = vrot.lane.b32.xlu0 %v1750, 32
        %v1753 = vpop.permute.xlu0 %1752
        %v1755 = vmul.f32 %v1733, %v1753
        %v1756 = vpack.c.bf16 %v1755, %v1755
        %1758 = vrot.lane.b32.xlu0 %v1756, 64
        %v1759 = vpop.permute.xlu0 %1758
        %v1761 = vld [vmem:[#allocation3] sm:$0x4]
        %v1762 = vsel %vm1108, %v1759, %v1761
        %1763 = vst [vmem:[#allocation3] sm:$0x4] %v1762
        %v1764 = vunpack.c.l.b16 %v1756
        %v1765 = vpack.c.b16 %v1764, %v1764
        %v1767 = vshrl.u32 %v1765, 16
        %v1769 = vrot.slane %v1767, 2
        %1770 = vrot.lane.b32.xlu0 %v1769, 64
        %v1771 = vpop.permute.xlu0 %1770
        %v1773 = vsel %vm655, %v1771, 0
        %1775 = vmatpush.bf16.msra.mxu0 0
        %1776 = vmatpush.bf16.msra.mxu0 0
        %1777 = vmatpush.bf16.msra.mxu0 0
        %1778 = vmatpush.bf16.msra.mxu0 0
        %1779 = vmatpush.bf16.msra.mxu0 0
        %1780 = vmatpush.bf16.msra.mxu0 0
        %1781 = vmatpush.bf16.msra.mxu0 %v1320
        %1782 = vmatpush.bf16.msra.mxu0 %v1319
        %1783 = vmatmul.bf16.gmra.mxu0 %v1773
        %v1784 = vpop.f32.mrf.mxu0
        %v1785 = vadd.f32 0.0, %v1784
        %v1786 = vpop.f32.mrf.mxu0
        %1787 = vdwg.mxu0
        %v1789 = vrot.slane %v1785, 2
        %v1791 = vadd.f32 %v1302, %v1789
        %v1792 = vxor.u32 %v1791, 2147483648
        %v1793 = vmul.f32 %v1792, 1.442695
        %v1794 = vpow.pop %v1793
        %v1795 = vadd.f32 %v1794, 1.0
        %v1796 = vrcp.pop %v1795
        %v1797 = vmul.f32 %v1795, %v1796
        %v1798 = vsub.f32 1.0, %v1797
        %v1799 = vmul.f32 %v1796, %v1798
        %v1800 = vadd.f32 %v1796, %v1799
        %vm1801 = vweird.f32 %v1795
        %vm1802 = vweird.f32 %v1796
        %vm1803 = vmor %vm1801, %vm1802
        %v1804 = vsel %vm1803, %v1796, %v1800
        %v1805 = vand.u32 2147483647, %v1795
        %vm1806 = vcmp.eq.f32.partialorder %v1805, 8.507059e+37
        %v1807 = vand.u32 %v1795, 2147483648
        %v1808 = vor.u32 1.1754944e-38, %v1807
        %v1809 = vsel %vm1806, %v1808, %v1804
        %v1810 = vmul.f32 1.0, %v1809
        %v1811 = vmul.f32 %v1810, 2.0
        %v1812 = vsub.f32 %v1811, 1.0
        %v1814 = vrot.slane %v1749, 7
        %v1816 = vmul.f32 %v1810, %v1814
        %1818 = vrot.lane.b32.xlu0 %v1812, 32
        %v1819 = vpop.permute.xlu0 %1818
        %v1821 = vmul.f32 %v1810, %v1819
        %1823 = vrot.lane.b32.xlu0 %v1821, 32
        %v1824 = vpop.permute.xlu0 %1823
        %v1826 = vadd.f32 %v1816, %v1824
        %v1827 = vtanh.pop %v1826
        %1829 = vrot.lane.b32.xlu0 %v1827, 32
        %v1830 = vpop.permute.xlu0 %1829
        %v1832 = vmul.f32 %v1810, %v1830
        %v1833 = vpack.c.bf16 %v1832, %v1832
        %1835 = vrot.lane.b32.xlu0 %v1833, 64
        %v1836 = vpop.permute.xlu0 %1835
        %v1838 = vld [vmem:[#allocation3] sm:$0x8]
        %v1839 = vsel %vm1188, %v1836, %v1838
        %1840 = vst [vmem:[#allocation3] sm:$0x8] %v1839
        %v1841 = vunpack.c.l.b16 %v1833
        %v1842 = vpack.c.b16 %v1841, %v1841
        %v1843 = vrot.slane %v1842, 3
        %1844 = vrot.lane.b32.xlu0 %v1843, 64
        %v1845 = vpop.permute.xlu0 %1844
        %v1847 = vsel %vm655, %v1845, 0
        %1849 = vmatpush.bf16.msra.mxu0 0
        %1850 = vmatpush.bf16.msra.mxu0 0
        %1851 = vmatpush.bf16.msra.mxu0 0
        %1852 = vmatpush.bf16.msra.mxu0 0
        %1853 = vmatpush.bf16.msra.mxu0 0
        %1854 = vmatpush.bf16.msra.mxu0 0
        %1855 = vmatpush.bf16.msra.mxu0 %v1320
        %1856 = vmatpush.bf16.msra.mxu0 %v1319
        %1857 = vmatmul.bf16.gmra.mxu0 %v1847
        %v1858 = vpop.f32.mrf.mxu0
        %v1859 = vadd.f32 0.0, %v1858
        %v1860 = vpop.f32.mrf.mxu0
        %1861 = vdwg.mxu0
        %v1863 = vrot.slane %v1859, 1
        %v1865 = vadd.f32 %v1302, %v1863
        %v1866 = vxor.u32 %v1865, 2147483648
        %v1867 = vmul.f32 %v1866, 1.442695
        %v1868 = vpow.pop %v1867
        %v1869 = vadd.f32 %v1868, 1.0
        %v1870 = vrcp.pop %v1869
        %v1871 = vmul.f32 %v1869, %v1870
        %v1872 = vsub.f32 1.0, %v1871
        %v1873 = vmul.f32 %v1870, %v1872
        %v1874 = vadd.f32 %v1870, %v1873
        %vm1875 = vweird.f32 %v1869
        %vm1876 = vweird.f32 %v1870
        %vm1877 = vmor %vm1875, %vm1876
        %v1878 = vsel %vm1877, %v1870, %v1874
        %v1879 = vand.u32 2147483647, %v1869
        %vm1880 = vcmp.eq.f32.partialorder %v1879, 8.507059e+37
        %v1881 = vand.u32 %v1869, 2147483648
        %v1882 = vor.u32 1.1754944e-38, %v1881
        %v1883 = vsel %vm1880, %v1882, %v1878
        %v1884 = vmul.f32 1.0, %v1883
        %v1885 = vmul.f32 %v1884, 2.0
        %v1886 = vsub.f32 %v1885, 1.0
        %v1888 = vrot.slane %v1826, 7
        %v1890 = vmul.f32 %v1884, %v1888
        %1892 = vrot.lane.b32.xlu0 %v1886, 32
        %v1893 = vpop.permute.xlu0 %1892
        %v1895 = vmul.f32 %v1884, %v1893
        %1897 = vrot.lane.b32.xlu0 %v1895, 32
        %v1898 = vpop.permute.xlu0 %1897
        %v1900 = vadd.f32 %v1890, %v1898
        %v1901 = vtanh.pop %v1900
        %1903 = vrot.lane.b32.xlu0 %v1901, 32
        %v1904 = vpop.permute.xlu0 %1903
        %v1906 = vmul.f32 %v1884, %v1904
        %v1907 = vpack.c.bf16 %v1906, %v1906
        %1909 = vrot.lane.b32.xlu0 %v1907, 64
        %v1910 = vpop.permute.xlu0 %1909
        %v1912 = vld [vmem:[#allocation3] sm:$0x8]
        %v1913 = vsel %vm1264, %v1910, %v1912
        %1914 = vst [vmem:[#allocation3] sm:$0x8] %v1913
        %v1915 = vld [vmem:[#allocation3] sm:$0xf]
        %v1916 = vld [vmem:[%s591] sm:$0xf]
        %v1917 = vld [vmem:[%s591 + $0x4] sm:$0x1]
        %v1918 = vld [vmem:[%s596] sm:$0xf]
        %v1919 = vld [vmem:[%s596 + $0x4] sm:$0xf]
        %v1920 = vld [vmem:[%s596 + $0x8] sm:$0xf]
        %v1921 = vld [vmem:[%s596 + $0xc] sm:$0xf]
        %v1926 = vunpack.c.l.b16 %v1918
        %v1927 = vunpack.c.l.b16 %v1919
        %v1928 = vunpack.c.l.b16 %v1920
        %v1929 = vunpack.c.l.b16 %v1921
        %v1930 = vpack.c.b16 %v1927, %v1926
        %v1931 = vpack.c.b16 %v1929, %v1928
        %v1935 = vsel %vm655, %v1915, 0
        %1937 = vmatpush.bf16.msra.mxu0 0
        %1938 = vmatpush.bf16.msra.mxu0 0
        %1939 = vmatpush.bf16.msra.mxu0 0
        %1940 = vmatpush.bf16.msra.mxu0 0
        %1941 = vmatpush.bf16.msra.mxu0 0
        %1942 = vmatpush.bf16.msra.mxu0 0
        %1943 = vmatpush.bf16.msra.mxu0 %v1931
        %1944 = vmatpush.bf16.msra.mxu0 %v1930
        %1945 = vmatmul.bf16.gmra.mxu0 %v1935
        %v1946 = vpop.f32.mrf.mxu0
        %v1947 = vadd.f32 0.0, %v1946
        %v1948 = vpop.f32.mrf.mxu0
        %1949 = vdwg.mxu0
        %v1950 = vmul.f32 %v1947, 0.17677669
        %v1951 = vld [vmem:[%s586] sm:$0x1]
        %v1953 = vperm.slane %v1951, 0
        %v1955 = vadd.f32 %v1950, %v1953
        %vm1956 = vcmask 80896
        %v1957 = vsel %vm1956, %v1955, -inf
        %1958 = vmax.xlane.f32.xlu0 %v1957
        %v1959 = vpop.xlane.xlu0 %1958
        %v1960 = vsub.f32 %v1955, %v1959
        %v1961 = vmul.f32 %v1960, 1.442695
        %v1962 = vpow.pop %v1961
        %v1963 = vsel %vm1956, %v1962, 0.0
        %1964 = vadd.xlane.f32.xlu0 %v1963
        %v1965 = vpop.xlane.xlu0 %1964
        %v1966 = vrcp.pop %v1965
        %v1967 = vmul.f32 %v1965, %v1966
        %v1968 = vsub.f32 1.0, %v1967
        %v1969 = vmul.f32 %v1966, %v1968
        %v1970 = vadd.f32 %v1966, %v1969
        %vm1971 = vweird.f32 %v1965
        %vm1972 = vweird.f32 %v1966
        %vm1973 = vmor %vm1971, %vm1972
        %v1974 = vsel %vm1973, %v1966, %v1970
        %v1975 = vand.u32 2147483647, %v1965
        %vm1976 = vcmp.eq.f32.partialorder %v1975, 8.507059e+37
        %v1977 = vand.u32 %v1965, 2147483648
        %v1978 = vor.u32 1.1754944e-38, %v1977
        %v1979 = vsel %vm1976, %v1978, %v1974
        %v1980 = vmul.f32 %v1962, %v1979
        %v1981 = vpack.c.bf16 %v1980, %v1980
        %v1984 = vunpack.c.l.b16 %v1916
        %v1985 = vunpack.c.l.b16 %v1917
        %v1986 = vpack.c.b16 %v1985, %v1984
        %v1988 = vsel %vm1956, %v1981, 0
        %vm1990 = vcmask 1044480
        %v1992 = vsel %vm1990, %v1986, 0
        %1994 = vmatpush.bf16.msra.mxu0 0
        %1995 = vmatpush.bf16.msra.mxu0 0
        %1996 = vmatpush.bf16.msra.mxu0 0
        %1997 = vmatpush.bf16.msra.mxu0 0
        %1998 = vmatpush.bf16.msra.mxu0 0
        %1999 = vmatpush.bf16.msra.mxu0 0
        %2000 = vmatpush.bf16.msra.mxu0 0
        %2001 = vmatpush.bf16.msra.mxu0 %v1992
        %2002 = vmatmul.bf16.gmra.mxu0 %v1988
        %v2003 = vpop.f32.mrf.mxu0
        %v2004 = vadd.f32 0.0, %v2003
        %v2005 = vpop.f32.mrf.mxu0
        %2006 = vdwg.mxu0
        %v2007 = vpack.c.bf16 %v2004, %v2004
        %v2009 = vunpack.c.l.b16 %v1915
        %v2010 = vpack.c.b16 %v2009, %v2009
        %2011 = vrot.lane.b32.xlu0 %v2010, 32
        %v2012 = vpop.permute.xlu0 %2011
        %v2015 = vsel %vm655, %v2007, %v2012
        %v2016 = vld [vmem:[%s12] sm:$0xf]
        %v2017 = vld [vmem:[%s12 + $0x4] sm:$0xf]
        %v2018 = vld [vmem:[%s12 + $0x8] sm:$0xf]
        %v2019 = vld [vmem:[%s12 + $0xc] sm:$0xf]
        %v2020 = vld [vmem:[%s12 + $0x10] sm:$0xf]
        %v2021 = vld [vmem:[%s12 + $0x14] sm:$0xf]
        %v2022 = vld [vmem:[%s12 + $0x18] sm:$0xf]
        %v2023 = vld [vmem:[%s12 + $0x1c] sm:$0xf]
        %v2024 = vld [vmem:[%s13] sm:$0x1]
        %v2026 = vperm.slane %v2024, 0
        %v2036 = vunpack.c.l.b16 %v2016
        %v2037 = vunpack.c.l.b16 %v2017
        %v2038 = vunpack.c.l.b16 %v2018
        %v2039 = vunpack.c.l.b16 %v2019
        %v2040 = vunpack.c.l.b16 %v2020
        %v2041 = vunpack.c.l.b16 %v2021
        %v2042 = vunpack.c.l.b16 %v2022
        %v2043 = vunpack.c.l.b16 %v2023
        %v2044 = vpack.c.b16 %v2037, %v2036
        %v2045 = vpack.c.b16 %v2039, %v2038
        %v2046 = vpack.c.b16 %v2041, %v2040
        %v2047 = vpack.c.b16 %v2043, %v2042
        %vm2052 = vcmask 523264
        %v2053 = vsel %vm2052, %v2015, 0
        %2055 = vmatpush.bf16.msra.mxu0 0
        %2056 = vmatpush.bf16.msra.mxu0 0
        %2057 = vmatpush.bf16.msra.mxu0 0
        %2058 = vmatpush.bf16.msra.mxu0 0
        %2059 = vmatpush.bf16.msra.mxu0 %v2047
        %2060 = vmatpush.bf16.msra.mxu0 %v2046
        %2061 = vmatpush.bf16.msra.mxu0 %v2045
        %2062 = vmatpush.bf16.msra.mxu0 %v2044
        %2063 = vmatmul.bf16.gmra.mxu0 %v2053
        %v2064 = vpop.f32.mrf.mxu0
        %v2065 = vadd.f32 %v2026, %v2064
        %v2066 = vpop.f32.mrf.mxu0
        %2067 = vdwg.mxu0
        %v2068 = vtanh.pop %v2065
        %v2069 = vpack.c.bf16 %v2068, %v2068
        %v2070 = vld [vmem:[%s14] sm:$0xf]
        %v2071 = vld [vmem:[%s14 + $0x4] sm:$0xf]
        %v2072 = vld [vmem:[%s14 + $0x8] sm:$0xf]
        %v2073 = vld [vmem:[%s14 + $0xc] sm:$0xf]
        %v2074 = vld [vmem:[%s15] sm:$0x1]
        %v2076 = vperm.slane %v2074, 0
        %v2082 = vunpack.c.l.b16 %v2070
        %v2083 = vunpack.c.l.b16 %v2071
        %v2084 = vunpack.c.l.b16 %v2072
        %v2085 = vunpack.c.l.b16 %v2073
        %v2086 = vpack.c.b16 %v2083, %v2082
        %v2087 = vpack.c.b16 %v2085, %v2084
        %v2091 = vsel %vm655, %v2069, 0
        %2093 = vmatpush.bf16.msra.mxu0 0
        %2094 = vmatpush.bf16.msra.mxu0 0
        %2095 = vmatpush.bf16.msra.mxu0 0
        %2096 = vmatpush.bf16.msra.mxu0 0
        %2097 = vmatpush.bf16.msra.mxu0 0
        %2098 = vmatpush.bf16.msra.mxu0 0
        %2099 = vmatpush.bf16.msra.mxu0 %v2087
        %2100 = vmatpush.bf16.msra.mxu0 %v2086
        %2101 = vmatmul.bf16.gmra.mxu0 %v2091
        %v2102 = vpop.f32.mrf.mxu0
        %v2103 = vadd.f32 %v2076, %v2102
        %v2104 = vpop.f32.mrf.mxu0
        %2105 = vdwg.mxu0
        %2106 = vst [vmem:[%s579] sm:$0xff] %v2103
        %s2107 = sand.u32 %s404, 1
        %s2108 = scalar_lea.sflag [#allocation5], %s2107
        %s2109 = sand.u32 %s404, 1
        %s2110 = smul.addr %s2109, 8
        %s2111 = scalar_lea.vmem [#allocation4], %s2110
        // Predicated region
        $region85: #{tpu_custom_call.1} parent=83 // pred_check
          %p2112 = pneg %p414
        $region86: #{tpu_custom_call.1} parent=83 // pred_check_branch
          %2114 = sbr.rel (%p2112) target = $region88
        $region87: #{tpu_custom_call.1} parent=83 // pred_region
          %2116 = vsyncadd %s2108, 0
          %s2117 = smul.addr %s30, 8
          %s2118 = scalar_lea.hbm %s16, %s2117
          %s2120 = sshll.u32 %s2111, 4
          %s2121 = int_to_ptr.vmem [resolvable:$true] %s2120
          %s2122 = sshll.u32 %s2118, 4
          %s2123 = int_to_ptr.hbm [resolvable:$true] %s2122
          %2125 = dma.vmem_to_hbm [thread:$0]  %s2121, 128, %s2123, %s2108
        $region88: #{tpu_custom_call.1} parent=83 // pred_fallthru
          _
      $region84: #{tpu_custom_call.1} parent=5 // pred_fallthru
        _
      %p2126 = scmp.le.s32.totalorder 2, %s25
      // Predicated region
      $region89: #{tpu_custom_call.1} parent=5 // pred_check
        %p2127 = pneg %p2126
      $region90: #{tpu_custom_call.1} parent=5 // pred_check_branch
        %2129 = sbr.rel (%p2127) target = $region92
      $region91: #{tpu_custom_call.1} parent=5 // pred_region
        %s2130 = ssub.s32 %s25, 2
        // Predicated region
        $region93: #{tpu_custom_call.1} parent=91 // pred_check
          %p2131 = pneg %p420
        $region94: #{tpu_custom_call.1} parent=91 // pred_check_branch
          %2133 = sbr.rel (%p2131) target = $region96
        $region95: #{tpu_custom_call.1} parent=91 // pred_region
          %s2134 = sand.u32 %s405, 1
          %s2135 = scalar_lea.sflag [#allocation5], %s2134
          %s2136 = sand.u32 %s405, 1
          %s2137 = smul.addr %s2136, 8
          %s2138 = scalar_lea.vmem [#allocation4], %s2137
          %2140 = dma.done %s2135, 128
        $region96: #{tpu_custom_call.1} parent=91 // pred_fallthru
          _
      $region92: #{tpu_custom_call.1} parent=5 // pred_fallthru
        _
    $region6: #{tpu_custom_call.1} parent=1 // loop_footer
      %s29 = sadd.s32 1, %s25
    $region7: #{tpu_custom_call.1} parent=1 // loop_footer_branch
      %24 = sbr.rel target = $region3
    $region8: #{tpu_custom_call.1} parent=1 // loop_exit
      _
    %2141 = vsyncpa [#allocation5], 1
    %s2142 = scalar_lea.sflag [#allocation5], 1
    %2143 = vsyncpa %s2142, 1

</llo_original>
